<compile_context>
chip_gen: v6e
topology: v6e:2x2x1
jax: 0.10.0
libtpu: 0.0.40
codegen_flags: <defaults>
</compile_context>

<pallas_src>
import functools

import jax
import jax.numpy as jnp
from jax.experimental import pallas as pl
from jax.experimental.pallas import tpu as pltpu


# ----------------------------------------------------------------------------
# Fused kernel: num_layers LSTM layers + mean-pool + classifier + log_softmax.
# ----------------------------------------------------------------------------
def make_fused_lstm_kernel(num_layers, T, B, H):
    def kernel(*refs):
        x_ref = refs[0]                                 # (T*B, D) time-major
        layer_refs = refs[1:1 + 3 * num_layers]         # (w_ih_t, w_hh_t, bias) per layer
        wc_ref = refs[1 + 3 * num_layers]               # (H, L)
        bc_ref = refs[2 + 3 * num_layers]               # (1, L)
        out_ref = refs[3 + 3 * num_layers]              # (T, L)

        # Load all weights once; everything is tiny and stays in vregs/VMEM.
        w_ih = [layer_refs[3 * l + 0][...] for l in range(num_layers)]   # (D|H, 4H)
        w_hh = [layer_refs[3 * l + 1][...] for l in range(num_layers)]   # (H, 4H)
        bias = [layer_refs[3 * l + 2][...] for l in range(num_layers)]   # (1, 4H)

        x = x_ref[...].astype(jnp.float32)              # (T*B, D)

        # Hoisted layer-0 input projection + bias: one big MXU matmul, fully
        # off the serial recurrence path.  (T*B, 4H) f32 = a couple of vregs,
        # so it is held as a register value -- no scratch.
        gx0 = jnp.dot(x, w_ih[0], preferred_element_type=jnp.float32) + bias[0]

        def lstm_cell(g, c_prev):
            # 3 EUP launches per step (was 5): full-width sigmoid + tanh over
            # the (B, 4H=128) gate vreg, static 32-lane slices for the gates,
            # plus the unavoidable tanh(c).
            sig = jax.nn.sigmoid(g)
            th = jnp.tanh(g)
            i_g = sig[:, 0 * H:1 * H]
            f_g = sig[:, 1 * H:2 * H]
            g_g = th[:, 2 * H:3 * H]
            o_g = sig[:, 3 * H:4 * H]
            c_new = f_g * c_prev + i_g * g_g
            h_new = o_g * jnp.tanh(c_new)
            return h_new, c_new

        h = [jnp.zeros((B, H), jnp.float32) for _ in range(num_layers)]
        c = [jnp.zeros((B, H), jnp.float32) for _ in range(num_layers)]
        # pending[l] = layer (l-1)'s hidden state feeding layer l's next step.
        pending = [None] * num_layers
        last_hs = []                                    # last layer h, time order

        # Wavefront over (layer, time): at step s, layer l processes t = s - l.
        # Work for different layers within a step is data-independent, so the
        # per-step MXU pushes / EUP launches of adjacent layers co-issue.
        for s in range(T + num_layers - 1):
            new_pending = [None] * num_layers
            for l in range(num_layers):
                t = s - l
                if not (0 <= t < T):
                    continue
                if l == 0:
                    g_in = gx0[t * B:(t + 1) * B, :]                    # (B, 4H)
                else:
                    # Per-step input projection keeps the wavefront unserialized.
                    g_in = (jnp.dot(pending[l], w_ih[l],
                                    preferred_element_type=jnp.float32)
                            + bias[l])                                  # (B, 4H)
                g = g_in + jnp.dot(h[l], w_hh[l],
                                   preferred_element_type=jnp.float32)  # (B, 4H)
                h[l], c[l] = lstm_cell(g, c[l])
                if l == num_layers - 1:
                    last_hs.append(h[l])
                else:
                    new_pending[l + 1] = h[l]
            for l in range(num_layers):
                if new_pending[l] is not None:
                    pending[l] = new_pending[l]

        # Epilogue (off the recurrence): mean over dim=1 (batch) of the
        # time-major (T, B, H) output, classifier, log_softmax, single store.
        pooled = jnp.concatenate(
            [jnp.mean(h_t, axis=0, keepdims=True) for h_t in last_hs], axis=0)  # (T, H)
        logits = (jnp.dot(pooled, wc_ref[...], preferred_element_type=jnp.float32)
                  + bc_ref[...])                                                # (T, L)
        m = jnp.max(logits, axis=-1, keepdims=True)
        z = logits - m
        lse = jnp.log(jnp.sum(jnp.exp(z), axis=-1, keepdims=True))
        out_ref[...] = (z - lse).astype(out_ref.dtype)

    return kernel


# ----------------------------------------------------------------------------
# Wrapper: one pallas_call for the whole forward pass (no grid, no scratch).
# ----------------------------------------------------------------------------
@functools.partial(jax.jit, static_argnames=("num_layers",))
def lstm_model_forward(embed, params, num_layers):
    """embed: (T, B, D) time-major -> (T, num_labels) log-probs."""
    T, B, D = embed.shape
    H = params["lstm_l0"]["w_hh_t"].shape[0]
    L = params["classifier"]["w_t"].shape[1]

    # Flatten time-major outside the kernel (free row-major reshape) so the
    # hoisted layer-0 projection is a single (T*B, D) @ (D, 4H) matmul.
    x2d = embed.reshape(T * B, D)

    inputs = [x2d]
    for layer in range(num_layers):
        p = params[f"lstm_l{layer}"]
        inputs += [p["w_ih_t"], p["w_hh_t"], p["bias"]]
    inputs += [params["classifier"]["w_t"], params["classifier"]["b"]]

    vmem = pl.BlockSpec(memory_space=pltpu.MemorySpace.VMEM)
    kernel = make_fused_lstm_kernel(num_layers, T, B, H)
    return pl.pallas_call(
        kernel,
        out_shape=jax.ShapeDtypeStruct((T, L), embed.dtype),
        in_specs=[vmem] * len(inputs),
        out_specs=vmem,
    )(*inputs)


# ----------------------------------------------------------------------------
# Pure-JAX reference (for correctness sanity check).
# ----------------------------------------------------------------------------
def lstm_model_reference(embed, params, num_layers):
    y = embed
    H = embed.shape[-1]
    for layer in range(num_layers):
        p = params[f"lstm_l{layer}"]

        def step(carry, x_t):
            h, c = carry
            gates = x_t @ p["w_ih_t"] + h @ p["w_hh_t"] + p["bias"][0]
            i_g = jax.nn.sigmoid(gates[:, 0 * H:1 * H])
            f_g = jax.nn.sigmoid(gates[:, 1 * H:2 * H])
            g_g = jnp.tanh(gates[:, 2 * H:3 * H])
            o_g = jax.nn.sigmoid(gates[:, 3 * H:4 * H])
            c_new = f_g * c + i_g * g_g
            h_new = o_g * jnp.tanh(c_new)
            return (h_new, c_new), h_new

        B = embed.shape[1]
        init = (jnp.zeros((B, H), jnp.float32), jnp.zeros((B, H), jnp.float32))
        _, y = jax.lax.scan(step, init, y)
    pooled = jnp.mean(y, axis=1)
    logits = pooled @ params["classifier"]["w_t"] + params["classifier"]["b"][0]
    return jax.nn.log_softmax(logits, axis=-1)


if __name__ == "__main__":
    # Small config consistent with the module's __init__:
    T = 8            # tokenizer max_length (sequence length)
    B = 2            # batch
    D = 32           # intermediate_dims (LSTM input == hidden size)
    H = D
    NUM_LAYERS = 2   # config['model']['num_layer']
    NUM_LABELS = 4

    key = jax.random.PRNGKey(0)
    keys = jax.random.split(key, 3 * NUM_LAYERS + 3)

    k_inv = 1.0 / jnp.sqrt(H)
    params = {}
    for layer in range(NUM_LAYERS):
        k0, k1, k2 = keys[3 * layer:3 * layer + 3]
        w_ih = jax.random.uniform(k0, (4 * H, D), jnp.float32, -k_inv, k_inv)
        w_hh = jax.random.uniform(k1, (4 * H, H), jnp.float32, -k_inv, k_inv)
        b = jax.random.uniform(k2, (2, 4 * H), jnp.float32, -k_inv, k_inv)
        params[f"lstm_l{layer}"] = {
            "w_ih_t": w_ih.T,                           # (D, 4H)
            "w_hh_t": w_hh.T,                           # (H, 4H)
            "bias": (b[0] + b[1]).reshape(1, 4 * H),    # b_ih + b_hh
        }
    kc0, kc1, kx = keys[3 * NUM_LAYERS:]
    wc = jax.random.uniform(kc0, (NUM_LABELS, H), jnp.float32, -k_inv, k_inv)
    bc = jax.random.uniform(kc1, (NUM_LABELS,), jnp.float32, -k_inv, k_inv)
    params["classifier"] = {"w_t": wc.T, "b": bc.reshape(1, NUM_LABELS)}

    # Synthetic deterministic "text embedding" output, time-major (T, B, D).
    embed = jax.random.normal(kx, (T, B, D), jnp.float32)

    logits = lstm_model_forward(embed, params, NUM_LAYERS)
    logits = jax.block_until_ready(logits)

    ref = lstm_model_reference(embed, params, NUM_LAYERS)
    assert logits.shape == (T, NUM_LABELS)
    assert jnp.allclose(logits, ref, atol=1e-4, rtol=1e-4), "mismatch vs ref"

    print("KERNEL_OK")
</pallas_src>

<mosaic_0001>
module attributes {stable_mosaic.version = 11 : i64} {
  func.func @kernel(%arg0: memref<16x32xf32, #tpu.memory_space<vmem>>, %arg1: memref<32x128xf32, #tpu.memory_space<vmem>>, %arg2: memref<32x128xf32, #tpu.memory_space<vmem>>, %arg3: memref<1x128xf32, #tpu.memory_space<vmem>>, %arg4: memref<32x128xf32, #tpu.memory_space<vmem>>, %arg5: memref<32x128xf32, #tpu.memory_space<vmem>>, %arg6: memref<1x128xf32, #tpu.memory_space<vmem>>, %arg7: memref<32x4xf32, #tpu.memory_space<vmem>>, %arg8: memref<1x4xf32, #tpu.memory_space<vmem>>, %arg9: memref<8x4xf32, #tpu.memory_space<vmem>>) attributes {dimension_semantics = [], scalar_prefetch = 0 : i64, scratch_operands = 0 : i64, tpu.core_type = #tpu.core_type<tc>} {
    %c0 = arith.constant 0 : index
    %c0_0 = arith.constant 0 : index
    %0 = vector.load %arg1[%c0, %c0_0] : memref<32x128xf32, #tpu.memory_space<vmem>>, vector<32x128xf32>
    %c0_1 = arith.constant 0 : index
    %c0_2 = arith.constant 0 : index
    %1 = vector.load %arg4[%c0_1, %c0_2] : memref<32x128xf32, #tpu.memory_space<vmem>>, vector<32x128xf32>
    %c0_3 = arith.constant 0 : index
    %c0_4 = arith.constant 0 : index
    %2 = vector.load %arg2[%c0_3, %c0_4] : memref<32x128xf32, #tpu.memory_space<vmem>>, vector<32x128xf32>
    %c0_5 = arith.constant 0 : index
    %c0_6 = arith.constant 0 : index
    %3 = vector.load %arg5[%c0_5, %c0_6] : memref<32x128xf32, #tpu.memory_space<vmem>>, vector<32x128xf32>
    %c0_7 = arith.constant 0 : index
    %c0_8 = arith.constant 0 : index
    %4 = vector.load %arg3[%c0_7, %c0_8] : memref<1x128xf32, #tpu.memory_space<vmem>>, vector<1x128xf32>
    %c0_9 = arith.constant 0 : index
    %c0_10 = arith.constant 0 : index
    %5 = vector.load %arg6[%c0_9, %c0_10] : memref<1x128xf32, #tpu.memory_space<vmem>>, vector<1x128xf32>
    %c0_11 = arith.constant 0 : index
    %c0_12 = arith.constant 0 : index
    %6 = vector.load %arg0[%c0_11, %c0_12] : memref<16x32xf32, #tpu.memory_space<vmem>>, vector<16x32xf32>
    %cst = arith.constant dense<0.000000e+00> : vector<16x128xf32>
    %7 = tpu.matmul %6, %0, %cst {dimension_numbers = #tpu.dot_dimension_numbers<[1], [0], [0], [1], [0, 0, 1, 1], [], []>} : vector<16x32xf32>, vector<32x128xf32>, vector<16x128xf32> -> vector<16x128xf32>
    %8 = vector.broadcast %4 : vector<1x128xf32> to vector<16x128xf32>
    %9 = arith.addf %7, %8 : vector<16x128xf32>
    %cst_13 = arith.constant 0.000000e+00 : f32
    %10 = vector.broadcast %cst_13 : f32 to vector<2x32xf32>
    %cst_14 = arith.constant 0.000000e+00 : f32
    %11 = vector.broadcast %cst_14 : f32 to vector<2x32xf32>
    %cst_15 = arith.constant 0.000000e+00 : f32
    %12 = vector.broadcast %cst_15 : f32 to vector<2x32xf32>
    %cst_16 = arith.constant 0.000000e+00 : f32
    %13 = vector.broadcast %cst_16 : f32 to vector<2x32xf32>
    %14 = vector.extract_strided_slice %9 {offsets = [0, 0], sizes = [2, 128], strides = [1, 1]} : vector<16x128xf32> to vector<2x128xf32>
    %cst_17 = arith.constant dense<0.000000e+00> : vector<2x128xf32>
    %15 = tpu.matmul %10, %2, %cst_17 {dimension_numbers = #tpu.dot_dimension_numbers<[1], [0], [0], [1], [0, 0, 1, 1], [], []>} : vector<2x32xf32>, vector<32x128xf32>, vector<2x128xf32> -> vector<2x128xf32>
    %16 = arith.addf %14, %15 : vector<2x128xf32>
    %17 = arith.negf %16 : vector<2x128xf32>
    %18 = math.exp %17 : vector<2x128xf32>
    %cst_18 = arith.constant 1.000000e+00 : f32
    %19 = vector.broadcast %cst_18 : f32 to vector<2x128xf32>
    %20 = arith.addf %19, %18 : vector<2x128xf32>
    %21 = arith.divf %19, %20 : vector<2x128xf32>
    %22 = math.tanh %16 : vector<2x128xf32>
    %23 = vector.extract_strided_slice %21 {offsets = [0, 0], sizes = [2, 32], strides = [1, 1]} : vector<2x128xf32> to vector<2x32xf32>
    %24 = vector.extract_strided_slice %21 {offsets = [0, 32], sizes = [2, 32], strides = [1, 1]} : vector<2x128xf32> to vector<2x32xf32>
    %25 = vector.extract_strided_slice %22 {offsets = [0, 64], sizes = [2, 32], strides = [1, 1]} : vector<2x128xf32> to vector<2x32xf32>
    %26 = vector.extract_strided_slice %21 {offsets = [0, 96], sizes = [2, 32], strides = [1, 1]} : vector<2x128xf32> to vector<2x32xf32>
    %27 = arith.mulf %24, %12 : vector<2x32xf32>
    %28 = arith.mulf %23, %25 : vector<2x32xf32>
    %29 = arith.addf %27, %28 : vector<2x32xf32>
    %30 = math.tanh %29 : vector<2x32xf32>
    %31 = arith.mulf %26, %30 : vector<2x32xf32>
    %32 = vector.extract_strided_slice %9 {offsets = [2, 0], sizes = [2, 128], strides = [1, 1]} : vector<16x128xf32> to vector<2x128xf32>
    %cst_19 = arith.constant dense<0.000000e+00> : vector<2x128xf32>
    %33 = tpu.matmul %31, %2, %cst_19 {dimension_numbers = #tpu.dot_dimension_numbers<[1], [0], [0], [1], [0, 0, 1, 1], [], []>} : vector<2x32xf32>, vector<32x128xf32>, vector<2x128xf32> -> vector<2x128xf32>
    %34 = arith.addf %32, %33 : vector<2x128xf32>
    %35 = arith.negf %34 : vector<2x128xf32>
    %36 = math.exp %35 : vector<2x128xf32>
    %cst_20 = arith.constant 1.000000e+00 : f32
    %37 = vector.broadcast %cst_20 : f32 to vector<2x128xf32>
    %38 = arith.addf %37, %36 : vector<2x128xf32>
    %39 = arith.divf %37, %38 : vector<2x128xf32>
    %40 = math.tanh %34 : vector<2x128xf32>
    %41 = vector.extract_strided_slice %39 {offsets = [0, 0], sizes = [2, 32], strides = [1, 1]} : vector<2x128xf32> to vector<2x32xf32>
    %42 = vector.extract_strided_slice %39 {offsets = [0, 32], sizes = [2, 32], strides = [1, 1]} : vector<2x128xf32> to vector<2x32xf32>
    %43 = vector.extract_strided_slice %40 {offsets = [0, 64], sizes = [2, 32], strides = [1, 1]} : vector<2x128xf32> to vector<2x32xf32>
    %44 = vector.extract_strided_slice %39 {offsets = [0, 96], sizes = [2, 32], strides = [1, 1]} : vector<2x128xf32> to vector<2x32xf32>
    %45 = arith.mulf %42, %29 : vector<2x32xf32>
    %46 = arith.mulf %41, %43 : vector<2x32xf32>
    %47 = arith.addf %45, %46 : vector<2x32xf32>
    %48 = math.tanh %47 : vector<2x32xf32>
    %49 = arith.mulf %44, %48 : vector<2x32xf32>
    %cst_21 = arith.constant dense<0.000000e+00> : vector<2x128xf32>
    %50 = tpu.matmul %31, %1, %cst_21 {dimension_numbers = #tpu.dot_dimension_numbers<[1], [0], [0], [1], [0, 0, 1, 1], [], []>} : vector<2x32xf32>, vector<32x128xf32>, vector<2x128xf32> -> vector<2x128xf32>
    %51 = vector.broadcast %5 : vector<1x128xf32> to vector<2x128xf32>
    %52 = arith.addf %50, %51 : vector<2x128xf32>
    %cst_22 = arith.constant dense<0.000000e+00> : vector<2x128xf32>
    %53 = tpu.matmul %11, %3, %cst_22 {dimension_numbers = #tpu.dot_dimension_numbers<[1], [0], [0], [1], [0, 0, 1, 1], [], []>} : vector<2x32xf32>, vector<32x128xf32>, vector<2x128xf32> -> vector<2x128xf32>
    %54 = arith.addf %52, %53 : vector<2x128xf32>
    %55 = arith.negf %54 : vector<2x128xf32>
    %56 = math.exp %55 : vector<2x128xf32>
    %cst_23 = arith.constant 1.000000e+00 : f32
    %57 = vector.broadcast %cst_23 : f32 to vector<2x128xf32>
    %58 = arith.addf %57, %56 : vector<2x128xf32>
    %59 = arith.divf %57, %58 : vector<2x128xf32>
    %60 = math.tanh %54 : vector<2x128xf32>
    %61 = vector.extract_strided_slice %59 {offsets = [0, 0], sizes = [2, 32], strides = [1, 1]} : vector<2x128xf32> to vector<2x32xf32>
    %62 = vector.extract_strided_slice %59 {offsets = [0, 32], sizes = [2, 32], strides = [1, 1]} : vector<2x128xf32> to vector<2x32xf32>
    %63 = vector.extract_strided_slice %60 {offsets = [0, 64], sizes = [2, 32], strides = [1, 1]} : vector<2x128xf32> to vector<2x32xf32>
    %64 = vector.extract_strided_slice %59 {offsets = [0, 96], sizes = [2, 32], strides = [1, 1]} : vector<2x128xf32> to vector<2x32xf32>
    %65 = arith.mulf %62, %13 : vector<2x32xf32>
    %66 = arith.mulf %61, %63 : vector<2x32xf32>
    %67 = arith.addf %65, %66 : vector<2x32xf32>
    %68 = math.tanh %67 : vector<2x32xf32>
    %69 = arith.mulf %64, %68 : vector<2x32xf32>
    %70 = vector.extract_strided_slice %9 {offsets = [4, 0], sizes = [2, 128], strides = [1, 1]} : vector<16x128xf32> to vector<2x128xf32>
    %cst_24 = arith.constant dense<0.000000e+00> : vector<2x128xf32>
    %71 = tpu.matmul %49, %2, %cst_24 {dimension_numbers = #tpu.dot_dimension_numbers<[1], [0], [0], [1], [0, 0, 1, 1], [], []>} : vector<2x32xf32>, vector<32x128xf32>, vector<2x128xf32> -> vector<2x128xf32>
    %72 = arith.addf %70, %71 : vector<2x128xf32>
    %73 = arith.negf %72 : vector<2x128xf32>
    %74 = math.exp %73 : vector<2x128xf32>
    %cst_25 = arith.constant 1.000000e+00 : f32
    %75 = vector.broadcast %cst_25 : f32 to vector<2x128xf32>
    %76 = arith.addf %75, %74 : vector<2x128xf32>
    %77 = arith.divf %75, %76 : vector<2x128xf32>
    %78 = math.tanh %72 : vector<2x128xf32>
    %79 = vector.extract_strided_slice %77 {offsets = [0, 0], sizes = [2, 32], strides = [1, 1]} : vector<2x128xf32> to vector<2x32xf32>
    %80 = vector.extract_strided_slice %77 {offsets = [0, 32], sizes = [2, 32], strides = [1, 1]} : vector<2x128xf32> to vector<2x32xf32>
    %81 = vector.extract_strided_slice %78 {offsets = [0, 64], sizes = [2, 32], strides = [1, 1]} : vector<2x128xf32> to vector<2x32xf32>
    %82 = vector.extract_strided_slice %77 {offsets = [0, 96], sizes = [2, 32], strides = [1, 1]} : vector<2x128xf32> to vector<2x32xf32>
    %83 = arith.mulf %80, %47 : vector<2x32xf32>
    %84 = arith.mulf %79, %81 : vector<2x32xf32>
    %85 = arith.addf %83, %84 : vector<2x32xf32>
    %86 = math.tanh %85 : vector<2x32xf32>
    %87 = arith.mulf %82, %86 : vector<2x32xf32>
    %cst_26 = arith.constant dense<0.000000e+00> : vector<2x128xf32>
    %88 = tpu.matmul %49, %1, %cst_26 {dimension_numbers = #tpu.dot_dimension_numbers<[1], [0], [0], [1], [0, 0, 1, 1], [], []>} : vector<2x32xf32>, vector<32x128xf32>, vector<2x128xf32> -> vector<2x128xf32>
    %89 = vector.broadcast %5 : vector<1x128xf32> to vector<2x128xf32>
    %90 = arith.addf %88, %89 : vector<2x128xf32>
    %cst_27 = arith.constant dense<0.000000e+00> : vector<2x128xf32>
    %91 = tpu.matmul %69, %3, %cst_27 {dimension_numbers = #tpu.dot_dimension_numbers<[1], [0], [0], [1], [0, 0, 1, 1], [], []>} : vector<2x32xf32>, vector<32x128xf32>, vector<2x128xf32> -> vector<2x128xf32>
    %92 = arith.addf %90, %91 : vector<2x128xf32>
    %93 = arith.negf %92 : vector<2x128xf32>
    %94 = math.exp %93 : vector<2x128xf32>
    %cst_28 = arith.constant 1.000000e+00 : f32
    %95 = vector.broadcast %cst_28 : f32 to vector<2x128xf32>
    %96 = arith.addf %95, %94 : vector<2x128xf32>
    %97 = arith.divf %95, %96 : vector<2x128xf32>
    %98 = math.tanh %92 : vector<2x128xf32>
    %99 = vector.extract_strided_slice %97 {offsets = [0, 0], sizes = [2, 32], strides = [1, 1]} : vector<2x128xf32> to vector<2x32xf32>
    %100 = vector.extract_strided_slice %97 {offsets = [0, 32], sizes = [2, 32], strides = [1, 1]} : vector<2x128xf32> to vector<2x32xf32>
    %101 = vector.extract_strided_slice %98 {offsets = [0, 64], sizes = [2, 32], strides = [1, 1]} : vector<2x128xf32> to vector<2x32xf32>
    %102 = vector.extract_strided_slice %97 {offsets = [0, 96], sizes = [2, 32], strides = [1, 1]} : vector<2x128xf32> to vector<2x32xf32>
    %103 = arith.mulf %100, %67 : vector<2x32xf32>
    %104 = arith.mulf %99, %101 : vector<2x32xf32>
    %105 = arith.addf %103, %104 : vector<2x32xf32>
    %106 = math.tanh %105 : vector<2x32xf32>
    %107 = arith.mulf %102, %106 : vector<2x32xf32>
    %108 = vector.extract_strided_slice %9 {offsets = [6, 0], sizes = [2, 128], strides = [1, 1]} : vector<16x128xf32> to vector<2x128xf32>
    %cst_29 = arith.constant dense<0.000000e+00> : vector<2x128xf32>
    %109 = tpu.matmul %87, %2, %cst_29 {dimension_numbers = #tpu.dot_dimension_numbers<[1], [0], [0], [1], [0, 0, 1, 1], [], []>} : vector<2x32xf32>, vector<32x128xf32>, vector<2x128xf32> -> vector<2x128xf32>
    %110 = arith.addf %108, %109 : vector<2x128xf32>
    %111 = arith.negf %110 : vector<2x128xf32>
    %112 = math.exp %111 : vector<2x128xf32>
    %cst_30 = arith.constant 1.000000e+00 : f32
    %113 = vector.broadcast %cst_30 : f32 to vector<2x128xf32>
    %114 = arith.addf %113, %112 : vector<2x128xf32>
    %115 = arith.divf %113, %114 : vector<2x128xf32>
    %116 = math.tanh %110 : vector<2x128xf32>
    %117 = vector.extract_strided_slice %115 {offsets = [0, 0], sizes = [2, 32], strides = [1, 1]} : vector<2x128xf32> to vector<2x32xf32>
    %118 = vector.extract_strided_slice %115 {offsets = [0, 32], sizes = [2, 32], strides = [1, 1]} : vector<2x128xf32> to vector<2x32xf32>
    %119 = vector.extract_strided_slice %116 {offsets = [0, 64], sizes = [2, 32], strides = [1, 1]} : vector<2x128xf32> to vector<2x32xf32>
    %120 = vector.extract_strided_slice %115 {offsets = [0, 96], sizes = [2, 32], strides = [1, 1]} : vector<2x128xf32> to vector<2x32xf32>
    %121 = arith.mulf %118, %85 : vector<2x32xf32>
    %122 = arith.mulf %117, %119 : vector<2x32xf32>
    %123 = arith.addf %121, %122 : vector<2x32xf32>
    %124 = math.tanh %123 : vector<2x32xf32>
    %125 = arith.mulf %120, %124 : vector<2x32xf32>
    %cst_31 = arith.constant dense<0.000000e+00> : vector<2x128xf32>
    %126 = tpu.matmul %87, %1, %cst_31 {dimension_numbers = #tpu.dot_dimension_numbers<[1], [0], [0], [1], [0, 0, 1, 1], [], []>} : vector<2x32xf32>, vector<32x128xf32>, vector<2x128xf32> -> vector<2x128xf32>
    %127 = vector.broadcast %5 : vector<1x128xf32> to vector<2x128xf32>
    %128 = arith.addf %126, %127 : vector<2x128xf32>
    %cst_32 = arith.constant dense<0.000000e+00> : vector<2x128xf32>
    %129 = tpu.matmul %107, %3, %cst_32 {dimension_numbers = #tpu.dot_dimension_numbers<[1], [0], [0], [1], [0, 0, 1, 1], [], []>} : vector<2x32xf32>, vector<32x128xf32>, vector<2x128xf32> -> vector<2x128xf32>
    %130 = arith.addf %128, %129 : vector<2x128xf32>
    %131 = arith.negf %130 : vector<2x128xf32>
    %132 = math.exp %131 : vector<2x128xf32>
    %cst_33 = arith.constant 1.000000e+00 : f32
    %133 = vector.broadcast %cst_33 : f32 to vector<2x128xf32>
    %134 = arith.addf %133, %132 : vector<2x128xf32>
    %135 = arith.divf %133, %134 : vector<2x128xf32>
    %136 = math.tanh %130 : vector<2x128xf32>
    %137 = vector.extract_strided_slice %135 {offsets = [0, 0], sizes = [2, 32], strides = [1, 1]} : vector<2x128xf32> to vector<2x32xf32>
    %138 = vector.extract_strided_slice %135 {offsets = [0, 32], sizes = [2, 32], strides = [1, 1]} : vector<2x128xf32> to vector<2x32xf32>
    %139 = vector.extract_strided_slice %136 {offsets = [0, 64], sizes = [2, 32], strides = [1, 1]} : vector<2x128xf32> to vector<2x32xf32>
    %140 = vector.extract_strided_slice %135 {offsets = [0, 96], sizes = [2, 32], strides = [1, 1]} : vector<2x128xf32> to vector<2x32xf32>
    %141 = arith.mulf %138, %105 : vector<2x32xf32>
    %142 = arith.mulf %137, %139 : vector<2x32xf32>
    %143 = arith.addf %141, %142 : vector<2x32xf32>
    %144 = math.tanh %143 : vector<2x32xf32>
    %145 = arith.mulf %140, %144 : vector<2x32xf32>
    %146 = vector.extract_strided_slice %9 {offsets = [8, 0], sizes = [2, 128], strides = [1, 1]} : vector<16x128xf32> to vector<2x128xf32>
    %cst_34 = arith.constant dense<0.000000e+00> : vector<2x128xf32>
    %147 = tpu.matmul %125, %2, %cst_34 {dimension_numbers = #tpu.dot_dimension_numbers<[1], [0], [0], [1], [0, 0, 1, 1], [], []>} : vector<2x32xf32>, vector<32x128xf32>, vector<2x128xf32> -> vector<2x128xf32>
    %148 = arith.addf %146, %147 : vector<2x128xf32>
    %149 = arith.negf %148 : vector<2x128xf32>
    %150 = math.exp %149 : vector<2x128xf32>
    %cst_35 = arith.constant 1.000000e+00 : f32
    %151 = vector.broadcast %cst_35 : f32 to vector<2x128xf32>
    %152 = arith.addf %151, %150 : vector<2x128xf32>
    %153 = arith.divf %151, %152 : vector<2x128xf32>
    %154 = math.tanh %148 : vector<2x128xf32>
    %155 = vector.extract_strided_slice %153 {offsets = [0, 0], sizes = [2, 32], strides = [1, 1]} : vector<2x128xf32> to vector<2x32xf32>
    %156 = vector.extract_strided_slice %153 {offsets = [0, 32], sizes = [2, 32], strides = [1, 1]} : vector<2x128xf32> to vector<2x32xf32>
    %157 = vector.extract_strided_slice %154 {offsets = [0, 64], sizes = [2, 32], strides = [1, 1]} : vector<2x128xf32> to vector<2x32xf32>
    %158 = vector.extract_strided_slice %153 {offsets = [0, 96], sizes = [2, 32], strides = [1, 1]} : vector<2x128xf32> to vector<2x32xf32>
    %159 = arith.mulf %156, %123 : vector<2x32xf32>
    %160 = arith.mulf %155, %157 : vector<2x32xf32>
    %161 = arith.addf %159, %160 : vector<2x32xf32>
    %162 = math.tanh %161 : vector<2x32xf32>
    %163 = arith.mulf %158, %162 : vector<2x32xf32>
    %cst_36 = arith.constant dense<0.000000e+00> : vector<2x128xf32>
    %164 = tpu.matmul %125, %1, %cst_36 {dimension_numbers = #tpu.dot_dimension_numbers<[1], [0], [0], [1], [0, 0, 1, 1], [], []>} : vector<2x32xf32>, vector<32x128xf32>, vector<2x128xf32> -> vector<2x128xf32>
    %165 = vector.broadcast %5 : vector<1x128xf32> to vector<2x128xf32>
    %166 = arith.addf %164, %165 : vector<2x128xf32>
    %cst_37 = arith.constant dense<0.000000e+00> : vector<2x128xf32>
    %167 = tpu.matmul %145, %3, %cst_37 {dimension_numbers = #tpu.dot_dimension_numbers<[1], [0], [0], [1], [0, 0, 1, 1], [], []>} : vector<2x32xf32>, vector<32x128xf32>, vector<2x128xf32> -> vector<2x128xf32>
    %168 = arith.addf %166, %167 : vector<2x128xf32>
    %169 = arith.negf %168 : vector<2x128xf32>
    %170 = math.exp %169 : vector<2x128xf32>
    %cst_38 = arith.constant 1.000000e+00 : f32
    %171 = vector.broadcast %cst_38 : f32 to vector<2x128xf32>
    %172 = arith.addf %171, %170 : vector<2x128xf32>
    %173 = arith.divf %171, %172 : vector<2x128xf32>
    %174 = math.tanh %168 : vector<2x128xf32>
    %175 = vector.extract_strided_slice %173 {offsets = [0, 0], sizes = [2, 32], strides = [1, 1]} : vector<2x128xf32> to vector<2x32xf32>
    %176 = vector.extract_strided_slice %173 {offsets = [0, 32], sizes = [2, 32], strides = [1, 1]} : vector<2x128xf32> to vector<2x32xf32>
    %177 = vector.extract_strided_slice %174 {offsets = [0, 64], sizes = [2, 32], strides = [1, 1]} : vector<2x128xf32> to vector<2x32xf32>
    %178 = vector.extract_strided_slice %173 {offsets = [0, 96], sizes = [2, 32], strides = [1, 1]} : vector<2x128xf32> to vector<2x32xf32>
    %179 = arith.mulf %176, %143 : vector<2x32xf32>
    %180 = arith.mulf %175, %177 : vector<2x32xf32>
    %181 = arith.addf %179, %180 : vector<2x32xf32>
    %182 = math.tanh %181 : vector<2x32xf32>
    %183 = arith.mulf %178, %182 : vector<2x32xf32>
    %184 = vector.extract_strided_slice %9 {offsets = [10, 0], sizes = [2, 128], strides = [1, 1]} : vector<16x128xf32> to vector<2x128xf32>
    %cst_39 = arith.constant dense<0.000000e+00> : vector<2x128xf32>
    %185 = tpu.matmul %163, %2, %cst_39 {dimension_numbers = #tpu.dot_dimension_numbers<[1], [0], [0], [1], [0, 0, 1, 1], [], []>} : vector<2x32xf32>, vector<32x128xf32>, vector<2x128xf32> -> vector<2x128xf32>
    %186 = arith.addf %184, %185 : vector<2x128xf32>
    %187 = arith.negf %186 : vector<2x128xf32>
    %188 = math.exp %187 : vector<2x128xf32>
    %cst_40 = arith.constant 1.000000e+00 : f32
    %189 = vector.broadcast %cst_40 : f32 to vector<2x128xf32>
    %190 = arith.addf %189, %188 : vector<2x128xf32>
    %191 = arith.divf %189, %190 : vector<2x128xf32>
    %192 = math.tanh %186 : vector<2x128xf32>
    %193 = vector.extract_strided_slice %191 {offsets = [0, 0], sizes = [2, 32], strides = [1, 1]} : vector<2x128xf32> to vector<2x32xf32>
    %194 = vector.extract_strided_slice %191 {offsets = [0, 32], sizes = [2, 32], strides = [1, 1]} : vector<2x128xf32> to vector<2x32xf32>
    %195 = vector.extract_strided_slice %192 {offsets = [0, 64], sizes = [2, 32], strides = [1, 1]} : vector<2x128xf32> to vector<2x32xf32>
    %196 = vector.extract_strided_slice %191 {offsets = [0, 96], sizes = [2, 32], strides = [1, 1]} : vector<2x128xf32> to vector<2x32xf32>
    %197 = arith.mulf %194, %161 : vector<2x32xf32>
    %198 = arith.mulf %193, %195 : vector<2x32xf32>
    %199 = arith.addf %197, %198 : vector<2x32xf32>
    %200 = math.tanh %199 : vector<2x32xf32>
    %201 = arith.mulf %196, %200 : vector<2x32xf32>
    %cst_41 = arith.constant dense<0.000000e+00> : vector<2x128xf32>
    %202 = tpu.matmul %163, %1, %cst_41 {dimension_numbers = #tpu.dot_dimension_numbers<[1], [0], [0], [1], [0, 0, 1, 1], [], []>} : vector<2x32xf32>, vector<32x128xf32>, vector<2x128xf32> -> vector<2x128xf32>
    %203 = vector.broadcast %5 : vector<1x128xf32> to vector<2x128xf32>
    %204 = arith.addf %202, %203 : vector<2x128xf32>
    %cst_42 = arith.constant dense<0.000000e+00> : vector<2x128xf32>
    %205 = tpu.matmul %183, %3, %cst_42 {dimension_numbers = #tpu.dot_dimension_numbers<[1], [0], [0], [1], [0, 0, 1, 1], [], []>} : vector<2x32xf32>, vector<32x128xf32>, vector<2x128xf32> -> vector<2x128xf32>
    %206 = arith.addf %204, %205 : vector<2x128xf32>
    %207 = arith.negf %206 : vector<2x128xf32>
    %208 = math.exp %207 : vector<2x128xf32>
    %cst_43 = arith.constant 1.000000e+00 : f32
    %209 = vector.broadcast %cst_43 : f32 to vector<2x128xf32>
    %210 = arith.addf %209, %208 : vector<2x128xf32>
    %211 = arith.divf %209, %210 : vector<2x128xf32>
    %212 = math.tanh %206 : vector<2x128xf32>
    %213 = vector.extract_strided_slice %211 {offsets = [0, 0], sizes = [2, 32], strides = [1, 1]} : vector<2x128xf32> to vector<2x32xf32>
    %214 = vector.extract_strided_slice %211 {offsets = [0, 32], sizes = [2, 32], strides = [1, 1]} : vector<2x128xf32> to vector<2x32xf32>
    %215 = vector.extract_strided_slice %212 {offsets = [0, 64], sizes = [2, 32], strides = [1, 1]} : vector<2x128xf32> to vector<2x32xf32>
    %216 = vector.extract_strided_slice %211 {offsets = [0, 96], sizes = [2, 32], strides = [1, 1]} : vector<2x128xf32> to vector<2x32xf32>
    %217 = arith.mulf %214, %181 : vector<2x32xf32>
    %218 = arith.mulf %213, %215 : vector<2x32xf32>
    %219 = arith.addf %217, %218 : vector<2x32xf32>
    %220 = math.tanh %219 : vector<2x32xf32>
    %221 = arith.mulf %216, %220 : vector<2x32xf32>
    %222 = vector.extract_strided_slice %9 {offsets = [12, 0], sizes = [2, 128], strides = [1, 1]} : vector<16x128xf32> to vector<2x128xf32>
    %cst_44 = arith.constant dense<0.000000e+00> : vector<2x128xf32>
    %223 = tpu.matmul %201, %2, %cst_44 {dimension_numbers = #tpu.dot_dimension_numbers<[1], [0], [0], [1], [0, 0, 1, 1], [], []>} : vector<2x32xf32>, vector<32x128xf32>, vector<2x128xf32> -> vector<2x128xf32>
    %224 = arith.addf %222, %223 : vector<2x128xf32>
    %225 = arith.negf %224 : vector<2x128xf32>
    %226 = math.exp %225 : vector<2x128xf32>
    %cst_45 = arith.constant 1.000000e+00 : f32
    %227 = vector.broadcast %cst_45 : f32 to vector<2x128xf32>
    %228 = arith.addf %227, %226 : vector<2x128xf32>
    %229 = arith.divf %227, %228 : vector<2x128xf32>
    %230 = math.tanh %224 : vector<2x128xf32>
    %231 = vector.extract_strided_slice %229 {offsets = [0, 0], sizes = [2, 32], strides = [1, 1]} : vector<2x128xf32> to vector<2x32xf32>
    %232 = vector.extract_strided_slice %229 {offsets = [0, 32], sizes = [2, 32], strides = [1, 1]} : vector<2x128xf32> to vector<2x32xf32>
    %233 = vector.extract_strided_slice %230 {offsets = [0, 64], sizes = [2, 32], strides = [1, 1]} : vector<2x128xf32> to vector<2x32xf32>
    %234 = vector.extract_strided_slice %229 {offsets = [0, 96], sizes = [2, 32], strides = [1, 1]} : vector<2x128xf32> to vector<2x32xf32>
    %235 = arith.mulf %232, %199 : vector<2x32xf32>
    %236 = arith.mulf %231, %233 : vector<2x32xf32>
    %237 = arith.addf %235, %236 : vector<2x32xf32>
    %238 = math.tanh %237 : vector<2x32xf32>
    %239 = arith.mulf %234, %238 : vector<2x32xf32>
    %cst_46 = arith.constant dense<0.000000e+00> : vector<2x128xf32>
    %240 = tpu.matmul %201, %1, %cst_46 {dimension_numbers = #tpu.dot_dimension_numbers<[1], [0], [0], [1], [0, 0, 1, 1], [], []>} : vector<2x32xf32>, vector<32x128xf32>, vector<2x128xf32> -> vector<2x128xf32>
    %241 = vector.broadcast %5 : vector<1x128xf32> to vector<2x128xf32>
    %242 = arith.addf %240, %241 : vector<2x128xf32>
    %cst_47 = arith.constant dense<0.000000e+00> : vector<2x128xf32>
    %243 = tpu.matmul %221, %3, %cst_47 {dimension_numbers = #tpu.dot_dimension_numbers<[1], [0], [0], [1], [0, 0, 1, 1], [], []>} : vector<2x32xf32>, vector<32x128xf32>, vector<2x128xf32> -> vector<2x128xf32>
    %244 = arith.addf %242, %243 : vector<2x128xf32>
    %245 = arith.negf %244 : vector<2x128xf32>
    %246 = math.exp %245 : vector<2x128xf32>
    %cst_48 = arith.constant 1.000000e+00 : f32
    %247 = vector.broadcast %cst_48 : f32 to vector<2x128xf32>
    %248 = arith.addf %247, %246 : vector<2x128xf32>
    %249 = arith.divf %247, %248 : vector<2x128xf32>
    %250 = math.tanh %244 : vector<2x128xf32>
    %251 = vector.extract_strided_slice %249 {offsets = [0, 0], sizes = [2, 32], strides = [1, 1]} : vector<2x128xf32> to vector<2x32xf32>
    %252 = vector.extract_strided_slice %249 {offsets = [0, 32], sizes = [2, 32], strides = [1, 1]} : vector<2x128xf32> to vector<2x32xf32>
    %253 = vector.extract_strided_slice %250 {offsets = [0, 64], sizes = [2, 32], strides = [1, 1]} : vector<2x128xf32> to vector<2x32xf32>
    %254 = vector.extract_strided_slice %249 {offsets = [0, 96], sizes = [2, 32], strides = [1, 1]} : vector<2x128xf32> to vector<2x32xf32>
    %255 = arith.mulf %252, %219 : vector<2x32xf32>
    %256 = arith.mulf %251, %253 : vector<2x32xf32>
    %257 = arith.addf %255, %256 : vector<2x32xf32>
    %258 = math.tanh %257 : vector<2x32xf32>
    %259 = arith.mulf %254, %258 : vector<2x32xf32>
    %260 = vector.extract_strided_slice %9 {offsets = [14, 0], sizes = [2, 128], strides = [1, 1]} : vector<16x128xf32> to vector<2x128xf32>
    %cst_49 = arith.constant dense<0.000000e+00> : vector<2x128xf32>
    %261 = tpu.matmul %239, %2, %cst_49 {dimension_numbers = #tpu.dot_dimension_numbers<[1], [0], [0], [1], [0, 0, 1, 1], [], []>} : vector<2x32xf32>, vector<32x128xf32>, vector<2x128xf32> -> vector<2x128xf32>
    %262 = arith.addf %260, %261 : vector<2x128xf32>
    %263 = arith.negf %262 : vector<2x128xf32>
    %264 = math.exp %263 : vector<2x128xf32>
    %cst_50 = arith.constant 1.000000e+00 : f32
    %265 = vector.broadcast %cst_50 : f32 to vector<2x128xf32>
    %266 = arith.addf %265, %264 : vector<2x128xf32>
    %267 = arith.divf %265, %266 : vector<2x128xf32>
    %268 = math.tanh %262 : vector<2x128xf32>
    %269 = vector.extract_strided_slice %267 {offsets = [0, 0], sizes = [2, 32], strides = [1, 1]} : vector<2x128xf32> to vector<2x32xf32>
    %270 = vector.extract_strided_slice %267 {offsets = [0, 32], sizes = [2, 32], strides = [1, 1]} : vector<2x128xf32> to vector<2x32xf32>
    %271 = vector.extract_strided_slice %268 {offsets = [0, 64], sizes = [2, 32], strides = [1, 1]} : vector<2x128xf32> to vector<2x32xf32>
    %272 = vector.extract_strided_slice %267 {offsets = [0, 96], sizes = [2, 32], strides = [1, 1]} : vector<2x128xf32> to vector<2x32xf32>
    %273 = arith.mulf %270, %237 : vector<2x32xf32>
    %274 = arith.mulf %269, %271 : vector<2x32xf32>
    %275 = arith.addf %273, %274 : vector<2x32xf32>
    %276 = math.tanh %275 : vector<2x32xf32>
    %277 = arith.mulf %272, %276 : vector<2x32xf32>
    %cst_51 = arith.constant dense<0.000000e+00> : vector<2x128xf32>
    %278 = tpu.matmul %239, %1, %cst_51 {dimension_numbers = #tpu.dot_dimension_numbers<[1], [0], [0], [1], [0, 0, 1, 1], [], []>} : vector<2x32xf32>, vector<32x128xf32>, vector<2x128xf32> -> vector<2x128xf32>
    %279 = vector.broadcast %5 : vector<1x128xf32> to vector<2x128xf32>
    %280 = arith.addf %278, %279 : vector<2x128xf32>
    %cst_52 = arith.constant dense<0.000000e+00> : vector<2x128xf32>
    %281 = tpu.matmul %259, %3, %cst_52 {dimension_numbers = #tpu.dot_dimension_numbers<[1], [0], [0], [1], [0, 0, 1, 1], [], []>} : vector<2x32xf32>, vector<32x128xf32>, vector<2x128xf32> -> vector<2x128xf32>
    %282 = arith.addf %280, %281 : vector<2x128xf32>
    %283 = arith.negf %282 : vector<2x128xf32>
    %284 = math.exp %283 : vector<2x128xf32>
    %cst_53 = arith.constant 1.000000e+00 : f32
    %285 = vector.broadcast %cst_53 : f32 to vector<2x128xf32>
    %286 = arith.addf %285, %284 : vector<2x128xf32>
    %287 = arith.divf %285, %286 : vector<2x128xf32>
    %288 = math.tanh %282 : vector<2x128xf32>
    %289 = vector.extract_strided_slice %287 {offsets = [0, 0], sizes = [2, 32], strides = [1, 1]} : vector<2x128xf32> to vector<2x32xf32>
    %290 = vector.extract_strided_slice %287 {offsets = [0, 32], sizes = [2, 32], strides = [1, 1]} : vector<2x128xf32> to vector<2x32xf32>
    %291 = vector.extract_strided_slice %288 {offsets = [0, 64], sizes = [2, 32], strides = [1, 1]} : vector<2x128xf32> to vector<2x32xf32>
    %292 = vector.extract_strided_slice %287 {offsets = [0, 96], sizes = [2, 32], strides = [1, 1]} : vector<2x128xf32> to vector<2x32xf32>
    %293 = arith.mulf %290, %257 : vector<2x32xf32>
    %294 = arith.mulf %289, %291 : vector<2x32xf32>
    %295 = arith.addf %293, %294 : vector<2x32xf32>
    %296 = math.tanh %295 : vector<2x32xf32>
    %297 = arith.mulf %292, %296 : vector<2x32xf32>
    %cst_54 = arith.constant dense<0.000000e+00> : vector<2x128xf32>
    %298 = tpu.matmul %277, %1, %cst_54 {dimension_numbers = #tpu.dot_dimension_numbers<[1], [0], [0], [1], [0, 0, 1, 1], [], []>} : vector<2x32xf32>, vector<32x128xf32>, vector<2x128xf32> -> vector<2x128xf32>
    %299 = vector.broadcast %5 : vector<1x128xf32> to vector<2x128xf32>
    %300 = arith.addf %298, %299 : vector<2x128xf32>
    %cst_55 = arith.constant dense<0.000000e+00> : vector<2x128xf32>
    %301 = tpu.matmul %297, %3, %cst_55 {dimension_numbers = #tpu.dot_dimension_numbers<[1], [0], [0], [1], [0, 0, 1, 1], [], []>} : vector<2x32xf32>, vector<32x128xf32>, vector<2x128xf32> -> vector<2x128xf32>
    %302 = arith.addf %300, %301 : vector<2x128xf32>
    %303 = arith.negf %302 : vector<2x128xf32>
    %304 = math.exp %303 : vector<2x128xf32>
    %cst_56 = arith.constant 1.000000e+00 : f32
    %305 = vector.broadcast %cst_56 : f32 to vector<2x128xf32>
    %306 = arith.addf %305, %304 : vector<2x128xf32>
    %307 = arith.divf %305, %306 : vector<2x128xf32>
    %308 = math.tanh %302 : vector<2x128xf32>
    %309 = vector.extract_strided_slice %307 {offsets = [0, 0], sizes = [2, 32], strides = [1, 1]} : vector<2x128xf32> to vector<2x32xf32>
    %310 = vector.extract_strided_slice %307 {offsets = [0, 32], sizes = [2, 32], strides = [1, 1]} : vector<2x128xf32> to vector<2x32xf32>
    %311 = vector.extract_strided_slice %308 {offsets = [0, 64], sizes = [2, 32], strides = [1, 1]} : vector<2x128xf32> to vector<2x32xf32>
    %312 = vector.extract_strided_slice %307 {offsets = [0, 96], sizes = [2, 32], strides = [1, 1]} : vector<2x128xf32> to vector<2x32xf32>
    %313 = arith.mulf %310, %295 : vector<2x32xf32>
    %314 = arith.mulf %309, %311 : vector<2x32xf32>
    %315 = arith.addf %313, %314 : vector<2x32xf32>
    %316 = math.tanh %315 : vector<2x32xf32>
    %317 = arith.mulf %312, %316 : vector<2x32xf32>
    %cst_57 = arith.constant dense<0.000000e+00> : vector<32xf32>
    %318 = vector.multi_reduction <add>, %69, %cst_57 [0] : vector<2x32xf32> to vector<32xf32>
    %319 = vector.shape_cast %318 : vector<32xf32> to vector<1x32xf32>
    %cst_58 = arith.constant 2.000000e+00 : f32
    %320 = vector.broadcast %cst_58 : f32 to vector<1x32xf32>
    %321 = arith.divf %319, %320 : vector<1x32xf32>
    %cst_59 = arith.constant dense<0.000000e+00> : vector<32xf32>
    %322 = vector.multi_reduction <add>, %107, %cst_59 [0] : vector<2x32xf32> to vector<32xf32>
    %323 = vector.shape_cast %322 : vector<32xf32> to vector<1x32xf32>
    %cst_60 = arith.constant 2.000000e+00 : f32
    %324 = vector.broadcast %cst_60 : f32 to vector<1x32xf32>
    %325 = arith.divf %323, %324 : vector<1x32xf32>
    %cst_61 = arith.constant dense<0.000000e+00> : vector<32xf32>
    %326 = vector.multi_reduction <add>, %145, %cst_61 [0] : vector<2x32xf32> to vector<32xf32>
    %327 = vector.shape_cast %326 : vector<32xf32> to vector<1x32xf32>
    %cst_62 = arith.constant 2.000000e+00 : f32
    %328 = vector.broadcast %cst_62 : f32 to vector<1x32xf32>
    %329 = arith.divf %327, %328 : vector<1x32xf32>
    %cst_63 = arith.constant dense<0.000000e+00> : vector<32xf32>
    %330 = vector.multi_reduction <add>, %183, %cst_63 [0] : vector<2x32xf32> to vector<32xf32>
    %331 = vector.shape_cast %330 : vector<32xf32> to vector<1x32xf32>
    %cst_64 = arith.constant 2.000000e+00 : f32
    %332 = vector.broadcast %cst_64 : f32 to vector<1x32xf32>
    %333 = arith.divf %331, %332 : vector<1x32xf32>
    %cst_65 = arith.constant dense<0.000000e+00> : vector<32xf32>
    %334 = vector.multi_reduction <add>, %221, %cst_65 [0] : vector<2x32xf32> to vector<32xf32>
    %335 = vector.shape_cast %334 : vector<32xf32> to vector<1x32xf32>
    %cst_66 = arith.constant 2.000000e+00 : f32
    %336 = vector.broadcast %cst_66 : f32 to vector<1x32xf32>
    %337 = arith.divf %335, %336 : vector<1x32xf32>
    %cst_67 = arith.constant dense<0.000000e+00> : vector<32xf32>
    %338 = vector.multi_reduction <add>, %259, %cst_67 [0] : vector<2x32xf32> to vector<32xf32>
    %339 = vector.shape_cast %338 : vector<32xf32> to vector<1x32xf32>
    %cst_68 = arith.constant 2.000000e+00 : f32
    %340 = vector.broadcast %cst_68 : f32 to vector<1x32xf32>
    %341 = arith.divf %339, %340 : vector<1x32xf32>
    %cst_69 = arith.constant dense<0.000000e+00> : vector<32xf32>
    %342 = vector.multi_reduction <add>, %297, %cst_69 [0] : vector<2x32xf32> to vector<32xf32>
    %343 = vector.shape_cast %342 : vector<32xf32> to vector<1x32xf32>
    %cst_70 = arith.constant 2.000000e+00 : f32
    %344 = vector.broadcast %cst_70 : f32 to vector<1x32xf32>
    %345 = arith.divf %343, %344 : vector<1x32xf32>
    %cst_71 = arith.constant dense<0.000000e+00> : vector<32xf32>
    %346 = vector.multi_reduction <add>, %317, %cst_71 [0] : vector<2x32xf32> to vector<32xf32>
    %347 = vector.shape_cast %346 : vector<32xf32> to vector<1x32xf32>
    %cst_72 = arith.constant 2.000000e+00 : f32
    %348 = vector.broadcast %cst_72 : f32 to vector<1x32xf32>
    %349 = arith.divf %347, %348 : vector<1x32xf32>
    %350 = tpu.concatenate %321, %325, %329, %333, %337, %341, %345, %349 in 0 : vector<1x32xf32>, vector<1x32xf32>, vector<1x32xf32>, vector<1x32xf32>, vector<1x32xf32>, vector<1x32xf32>, vector<1x32xf32>, vector<1x32xf32> -> vector<8x32xf32>
    %c0_73 = arith.constant 0 : index
    %c0_74 = arith.constant 0 : index
    %351 = vector.load %arg7[%c0_73, %c0_74] : memref<32x4xf32, #tpu.memory_space<vmem>>, vector<32x4xf32>
    %cst_75 = arith.constant dense<0.000000e+00> : vector<8x4xf32>
    %352 = tpu.matmul %350, %351, %cst_75 {dimension_numbers = #tpu.dot_dimension_numbers<[1], [0], [0], [1], [0, 0, 1, 1], [], []>} : vector<8x32xf32>, vector<32x4xf32>, vector<8x4xf32> -> vector<8x4xf32>
    %c0_76 = arith.constant 0 : index
    %c0_77 = arith.constant 0 : index
    %353 = vector.load %arg8[%c0_76, %c0_77] : memref<1x4xf32, #tpu.memory_space<vmem>>, vector<1x4xf32>
    %354 = vector.broadcast %353 : vector<1x4xf32> to vector<8x4xf32>
    %355 = arith.addf %352, %354 : vector<8x4xf32>
    %cst_78 = arith.constant dense<0xFF800000> : vector<8xf32>
    %356 = vector.multi_reduction <maximumf>, %355, %cst_78 [1] : vector<8x4xf32> to vector<8xf32>
    %357 = vector.shape_cast %356 : vector<8xf32> to vector<8x1xf32>
    %358 = vector.broadcast %357 : vector<8x1xf32> to vector<8x4xf32>
    %359 = arith.subf %355, %358 : vector<8x4xf32>
    %360 = math.exp %359 : vector<8x4xf32>
    %cst_79 = arith.constant dense<0.000000e+00> : vector<8xf32>
    %361 = vector.multi_reduction <add>, %360, %cst_79 [1] : vector<8x4xf32> to vector<8xf32>
    %362 = vector.shape_cast %361 : vector<8xf32> to vector<8x1xf32>
    %363 = math.log %362 : vector<8x1xf32>
    %364 = vector.broadcast %363 : vector<8x1xf32> to vector<8x4xf32>
    %365 = arith.subf %359, %364 : vector<8x4xf32>
    %c0_80 = arith.constant 0 : index
    %c0_81 = arith.constant 0 : index
    %366 = vector.load %arg9[%c0_80, %c0_81] : memref<8x4xf32, #tpu.memory_space<vmem>>, vector<8x4xf32>
    tpu.vector_store %arg9[%c0_80, %c0_81], %365 {strides = array<i32>} : memref<8x4xf32, #tpu.memory_space<vmem>>, vector<8x4xf32>,
    return
  }
}

</mosaic_0001>

<llo_original>
// kernel: lstm_model_forward.1
$region0: #{lstm_model_forward.1}
  #allocation0 [shape = 'u32[]', space=smem, size = 0x4, offset = 0x4, fixed_abs, tag = 'smem constant byte address 0x4 - core index']
  #allocation1 [shape = 'u32[144,128]{1,0:T(1,128)}', space=vmem, size = 0x12000, scoped, tag = 'internal scratch']
  %s0 = inlined_call_operand.hbm [shape: f32[16,32], index: 0, kind: input, shape index: {}]
  %s1 = inlined_call_operand.vmem [shape: f32[32,128], index: 1, kind: input, shape index: {}]
  %s2 = inlined_call_operand.hbm [shape: f32[32,128], index: 2, kind: input, shape index: {}]
  %s3 = inlined_call_operand.vmem [shape: f32[1,128], index: 3, kind: input, shape index: {}]
  %s4 = inlined_call_operand.hbm [shape: f32[32,128], index: 4, kind: input, shape index: {}]
  %s5 = inlined_call_operand.hbm [shape: f32[32,128], index: 5, kind: input, shape index: {}]
  %s6 = inlined_call_operand.vmem [shape: f32[1,128], index: 6, kind: input, shape index: {}]
  %s7 = inlined_call_operand.vmem [shape: f32[32,4], index: 7, kind: input, shape index: {}]
  %s8 = inlined_call_operand.vmem [shape: f32[1,4], index: 8, kind: input, shape index: {}]
  %s9 = inlined_call_operand.vmem [shape: f32[8,4], index: 9, kind: output, shape index: {}]
  %s10 = sld [smem:[#allocation0]]
  $region62: #{lstm_model_forward.1} parent=0
    _
  %s12 = ssub.s32 1, %s10
  %s13 = scalar_select 0, %s12, %s10
  $region1: #{lstm_model_forward.1} parent=0
    #allocation2 [shape = 'u8[8192]{0}', space=vmem, size = 0x2000, scoped, tag = 'input window, operand 0, single buffered']
    #allocation3 [shape = 's32[1]{0}', space=sflag, size = 0x4, scoped, tag = 'scoped memory for lstm_model_forward.1']
    #allocation4 [shape = 'u8[16384]{0}', space=vmem, size = 0x4000, scoped, tag = 'input window, operand 2, single buffered']
    #allocation5 [shape = 's32[1]{0}', space=sflag, size = 0x4, scoped, tag = 'scoped memory for lstm_model_forward.1']
    #allocation6 [shape = 'u8[16384]{0}', space=vmem, size = 0x4000, scoped, tag = 'input window, operand 4, single buffered']
    #allocation7 [shape = 'u8[16384]{0}', space=vmem, size = 0x4000, scoped, tag = 'input window, operand 5, single buffered']
    #allocation8 [shape = 's32[1]{0}', space=sflag, size = 0x4, scoped, tag = 'scoped memory for lstm_model_forward.1']
    %14 = vsyncpa [#allocation3], 0
    %15 = vsyncpa [#allocation5], 0
    %16 = vsyncpa [#allocation8], 0
    // Predicated region
    $region2: #{lstm_model_forward.1} parent=1 // pred_check
      _
    $region3: #{lstm_model_forward.1} parent=1 // pred_check_branch
      %18 = sbr.rel (0) target = $region5
    $region4: #{lstm_model_forward.1} parent=1 // pred_region
      %s20 = ssub.s32 256, 256
      %21 = vsyncadd [#allocation3], %s20
      %s22 = sshll.u32 [#allocation2], 4
      %s23 = int_to_ptr.vmem [resolvable:$true] %s22
      %28 = dma.hbm_to_vmem [thread:$0]  %s0, 256, %s23, [#allocation3], 128, 128, 8
    $region5: #{lstm_model_forward.1} parent=1 // pred_fallthru
      _
    // Predicated region
    $region6: #{lstm_model_forward.1} parent=1 // pred_check
      _
    $region7: #{lstm_model_forward.1} parent=1 // pred_check_branch
      %30 = sbr.rel (0) target = $region9
    $region8: #{lstm_model_forward.1} parent=1 // pred_region
      _
    $region9: #{lstm_model_forward.1} parent=1 // pred_fallthru
      _
    // Predicated region
    $region10: #{lstm_model_forward.1} parent=1 // pred_check
      _
    $region11: #{lstm_model_forward.1} parent=1 // pred_check_branch
      %32 = sbr.rel (0) target = $region13
    $region12: #{lstm_model_forward.1} parent=1 // pred_region
      %s34 = ssub.s32 512, 512
      %35 = vsyncadd [#allocation5], %s34
      %s36 = sshll.u32 [#allocation4], 4
      %s37 = int_to_ptr.vmem [resolvable:$true] %s36
      %42 = dma.hbm_to_vmem [thread:$0]  %s2, 512, %s37, [#allocation5], 128, 128, 8
    $region13: #{lstm_model_forward.1} parent=1 // pred_fallthru
      _
    // Predicated region
    $region14: #{lstm_model_forward.1} parent=1 // pred_check
      _
    $region15: #{lstm_model_forward.1} parent=1 // pred_check_branch
      %44 = sbr.rel (0) target = $region17
    $region16: #{lstm_model_forward.1} parent=1 // pred_region
      _
    $region17: #{lstm_model_forward.1} parent=1 // pred_fallthru
      _
    // Predicated region
    $region18: #{lstm_model_forward.1} parent=1 // pred_check
      _
    $region19: #{lstm_model_forward.1} parent=1 // pred_check_branch
      %46 = sbr.rel (0) target = $region21
    $region20: #{lstm_model_forward.1} parent=1 // pred_region
      %s48 = ssub.s32 512, 512
      %49 = vsyncadd [#allocation5], %s48
      %s50 = sshll.u32 [#allocation6], 4
      %s51 = int_to_ptr.vmem [resolvable:$true] %s50
      %56 = dma.hbm_to_vmem [thread:$0]  %s4, 512, %s51, [#allocation5], 128, 128, 8
    $region21: #{lstm_model_forward.1} parent=1 // pred_fallthru
      _
    // Predicated region
    $region22: #{lstm_model_forward.1} parent=1 // pred_check
      _
    $region23: #{lstm_model_forward.1} parent=1 // pred_check_branch
      %58 = sbr.rel (0) target = $region25
    $region24: #{lstm_model_forward.1} parent=1 // pred_region
      %s60 = ssub.s32 512, 512
      %61 = vsyncadd [#allocation8], %s60
      %s62 = sshll.u32 [#allocation7], 4
      %s63 = int_to_ptr.vmem [resolvable:$true] %s62
      %68 = dma.hbm_to_vmem [thread:$0]  %s5, 512, %s63, [#allocation8], 128, 128, 8
    $region25: #{lstm_model_forward.1} parent=1 // pred_fallthru
      _
    // Predicated region
    $region26: #{lstm_model_forward.1} parent=1 // pred_check
      _
    $region27: #{lstm_model_forward.1} parent=1 // pred_check_branch
      %70 = sbr.rel (0) target = $region29
    $region28: #{lstm_model_forward.1} parent=1 // pred_region
      _
    $region29: #{lstm_model_forward.1} parent=1 // pred_fallthru
      _
    // Predicated region
    $region30: #{lstm_model_forward.1} parent=1 // pred_check
      _
    $region31: #{lstm_model_forward.1} parent=1 // pred_check_branch
      %72 = sbr.rel (0) target = $region33
    $region32: #{lstm_model_forward.1} parent=1 // pred_region
      _
    $region33: #{lstm_model_forward.1} parent=1 // pred_fallthru
      _
    // Predicated region
    $region34: #{lstm_model_forward.1} parent=1 // pred_check
      _
    $region35: #{lstm_model_forward.1} parent=1 // pred_check_branch
      %74 = sbr.rel (0) target = $region37
    $region36: #{lstm_model_forward.1} parent=1 // pred_region
      _
    $region37: #{lstm_model_forward.1} parent=1 // pred_fallthru
      _
    // Predicated region
    $region38: #{lstm_model_forward.1} parent=1 // pred_check
      _
    $region39: #{lstm_model_forward.1} parent=1 // pred_check_branch
      %76 = sbr.rel (0) target = $region41
    $region40: #{lstm_model_forward.1} parent=1 // pred_region
      %77 = dma.done [#allocation3], 256
    $region41: #{lstm_model_forward.1} parent=1 // pred_fallthru
      _
    // Predicated region
    $region42: #{lstm_model_forward.1} parent=1 // pred_check
      _
    $region43: #{lstm_model_forward.1} parent=1 // pred_check_branch
      %79 = sbr.rel (0) target = $region45
    $region44: #{lstm_model_forward.1} parent=1 // pred_region
      %80 = dma.done [#allocation5], 512
    $region45: #{lstm_model_forward.1} parent=1 // pred_fallthru
      _
    // Predicated region
    $region46: #{lstm_model_forward.1} parent=1 // pred_check
      _
    $region47: #{lstm_model_forward.1} parent=1 // pred_check_branch
      %82 = sbr.rel (0) target = $region49
    $region48: #{lstm_model_forward.1} parent=1 // pred_region
      %83 = dma.done [#allocation5], 512
    $region49: #{lstm_model_forward.1} parent=1 // pred_fallthru
      _
    // Predicated region
    $region50: #{lstm_model_forward.1} parent=1 // pred_check
      _
    $region51: #{lstm_model_forward.1} parent=1 // pred_check_branch
      %85 = sbr.rel (0) target = $region53
    $region52: #{lstm_model_forward.1} parent=1 // pred_region
      %86 = dma.done [#allocation8], 512
    $region53: #{lstm_model_forward.1} parent=1 // pred_fallthru
      _
    %v87 = vld [vmem:[%s1] sm:$0xff]
    %v88 = vld [vmem:[%s1 + $0x8] sm:$0xff]
    %v89 = vld [vmem:[%s1 + $0x10] sm:$0xff]
    %v90 = vld [vmem:[%s1 + $0x18] sm:$0xff]
    %v91 = vld [vmem:[#allocation6] sm:$0xff]
    %v92 = vld [vmem:[#allocation6 + $0x8] sm:$0xff]
    %v93 = vld [vmem:[#allocation6 + $0x10] sm:$0xff]
    %v94 = vld [vmem:[#allocation6 + $0x18] sm:$0xff]
    %v95 = vld [vmem:[#allocation4] sm:$0xff]
    %v96 = vld [vmem:[#allocation4 + $0x8] sm:$0xff]
    %v97 = vld [vmem:[#allocation4 + $0x10] sm:$0xff]
    %v98 = vld [vmem:[#allocation4 + $0x18] sm:$0xff]
    %v99 = vld [vmem:[#allocation7] sm:$0xff]
    %v100 = vld [vmem:[#allocation7 + $0x8] sm:$0xff]
    %v101 = vld [vmem:[#allocation7 + $0x10] sm:$0xff]
    %v102 = vld [vmem:[#allocation7 + $0x18] sm:$0xff]
    %v103 = vld [vmem:[%s3] sm:$0x1]
    %v104 = vld [vmem:[%s6] sm:$0x1]
    %v105 = vld [vmem:[#allocation2] sm:$0xff]
    %v106 = vld [vmem:[#allocation2 + $0x8] sm:$0xff]
    %v108 = vlaneseq
    %v109 = vshrl.u32 %v108, 7
    %v110 = vsub.s32 0, %v109
    %v111 = vrot.slane %v103, %v110
    %vm113 = vcmask 261120
    %v115 = vsel %vm113, %v105, 0
    %v118 = vsel %vm113, %v106, 0
    %120 = vmatprep.subr.mxu0 0.0
    %121 = vmatpush1.msra.mxu0 0.0
    %122 = vmatprep.subr.mxu0 0.0
    %123 = vmatpush1.msra.mxu0 0.0
    %124 = vmatprep.subr.mxu0 0.0
    %125 = vmatpush1.msra.mxu0 0.0
    %126 = vmatprep.subr.mxu0 0.0
    %127 = vmatpush1.msra.mxu0 0.0
    %128 = vmatprep.subr.mxu0 0.0
    %129 = vmatpush1.msra.mxu0 0.0
    %130 = vmatprep.subr.mxu0 0.0
    %131 = vmatpush1.msra.mxu0 0.0
    %132 = vmatprep.subr.mxu0 0.0
    %133 = vmatpush1.msra.mxu0 0.0
    %134 = vmatprep.subr.mxu0 0.0
    %135 = vmatpush1.msra.mxu0 0.0
    %136 = vmatprep.subr.mxu0 0.0
    %137 = vmatpush1.msra.mxu0 0.0
    %138 = vmatprep.subr.mxu0 0.0
    %139 = vmatpush1.msra.mxu0 0.0
    %140 = vmatprep.subr.mxu0 0.0
    %141 = vmatpush1.msra.mxu0 0.0
    %142 = vmatprep.subr.mxu0 0.0
    %143 = vmatpush1.msra.mxu0 0.0
    %144 = vmatprep.subr.mxu0 0.0
    %145 = vmatpush1.msra.mxu0 %v90
    %146 = vmatprep.subr.mxu0 0.0
    %147 = vmatpush1.msra.mxu0 %v89
    %148 = vmatprep.subr.mxu0 0.0
    %149 = vmatpush1.msra.mxu0 %v88
    %150 = vmatprep.subr.mxu0 0.0
    %151 = vmatpush1.msra.mxu0 %v87
    %152 = vmatprep.subr.mxu0 0.0
    %153 = vmatpush2.msra.mxu0 0.0
    %154 = vmatprep.subr.mxu0 0.0
    %155 = vmatpush2.msra.mxu0 0.0
    %156 = vmatprep.subr.mxu0 0.0
    %157 = vmatpush2.msra.mxu0 0.0
    %158 = vmatprep.subr.mxu0 0.0
    %159 = vmatpush2.msra.mxu0 0.0
    %160 = vmatprep.subr.mxu0 0.0
    %161 = vmatpush2.msra.mxu0 0.0
    %162 = vmatprep.subr.mxu0 0.0
    %163 = vmatpush2.msra.mxu0 0.0
    %164 = vmatprep.subr.mxu0 0.0
    %165 = vmatpush2.msra.mxu0 0.0
    %166 = vmatprep.subr.mxu0 0.0
    %167 = vmatpush2.msra.mxu0 0.0
    %168 = vmatprep.subr.mxu0 0.0
    %169 = vmatpush2.msra.mxu0 0.0
    %170 = vmatprep.subr.mxu0 0.0
    %171 = vmatpush2.msra.mxu0 0.0
    %172 = vmatprep.subr.mxu0 0.0
    %173 = vmatpush2.msra.mxu0 0.0
    %174 = vmatprep.subr.mxu0 0.0
    %175 = vmatpush2.msra.mxu0 0.0
    %176 = vmatprep.subr.mxu0 0.0
    %177 = vmatpush2.msra.mxu0 0.0
    %178 = vmatprep.subr.mxu0 0.0
    %179 = vmatpush2.msra.mxu0 0.0
    %180 = vmatprep.subr.mxu0 0.0
    %181 = vmatpush2.msra.mxu0 0.0
    %182 = vmatprep.subr.mxu0 0.0
    %183 = vmatpush2.msra.mxu0 0.0
    %184 = vmatprep.mubr.f32.mxu0 0.0
    %185 = vmatmul.mubr.f32.gmra.mxu0 %v115
    %v186 = vpop.f32.mrf.mxu0
    %v187 = vadd.f32 %v111, %v186
    %v188 = vpop.f32.mrf.mxu0
    %189 = vmatprep.mubr.f32.mxu0 0.0
    %190 = vmatmul.mubr.f32.gmra.mxu0 %v118
    %v191 = vpop.f32.mrf.mxu0
    %v192 = vadd.f32 %v111, %v191
    %v193 = vpop.f32.mrf.mxu0
    %194 = vdwg.mxu0
    %v196 = vsel %vm113, 0.0, 0
    %198 = vmatprep.subr.mxu0 0.0
    %199 = vmatpush1.msra.mxu0 0.0
    %200 = vmatprep.subr.mxu0 0.0
    %201 = vmatpush1.msra.mxu0 0.0
    %202 = vmatprep.subr.mxu0 0.0
    %203 = vmatpush1.msra.mxu0 0.0
    %204 = vmatprep.subr.mxu0 0.0
    %205 = vmatpush1.msra.mxu0 0.0
    %206 = vmatprep.subr.mxu0 0.0
    %207 = vmatpush1.msra.mxu0 0.0
    %208 = vmatprep.subr.mxu0 0.0
    %209 = vmatpush1.msra.mxu0 0.0
    %210 = vmatprep.subr.mxu0 0.0
    %211 = vmatpush1.msra.mxu0 0.0
    %212 = vmatprep.subr.mxu0 0.0
    %213 = vmatpush1.msra.mxu0 0.0
    %214 = vmatprep.subr.mxu0 0.0
    %215 = vmatpush1.msra.mxu0 0.0
    %216 = vmatprep.subr.mxu0 0.0
    %217 = vmatpush1.msra.mxu0 0.0
    %218 = vmatprep.subr.mxu0 0.0
    %219 = vmatpush1.msra.mxu0 0.0
    %220 = vmatprep.subr.mxu0 0.0
    %221 = vmatpush1.msra.mxu0 0.0
    %222 = vmatprep.subr.mxu0 0.0
    %223 = vmatpush1.msra.mxu0 %v98
    %224 = vmatprep.subr.mxu0 0.0
    %225 = vmatpush1.msra.mxu0 %v97
    %226 = vmatprep.subr.mxu0 0.0
    %227 = vmatpush1.msra.mxu0 %v96
    %228 = vmatprep.subr.mxu0 0.0
    %229 = vmatpush1.msra.mxu0 %v95
    %230 = vmatprep.subr.mxu0 0.0
    %231 = vmatpush2.msra.mxu0 0.0
    %232 = vmatprep.subr.mxu0 0.0
    %233 = vmatpush2.msra.mxu0 0.0
    %234 = vmatprep.subr.mxu0 0.0
    %235 = vmatpush2.msra.mxu0 0.0
    %236 = vmatprep.subr.mxu0 0.0
    %237 = vmatpush2.msra.mxu0 0.0
    %238 = vmatprep.subr.mxu0 0.0
    %239 = vmatpush2.msra.mxu0 0.0
    %240 = vmatprep.subr.mxu0 0.0
    %241 = vmatpush2.msra.mxu0 0.0
    %242 = vmatprep.subr.mxu0 0.0
    %243 = vmatpush2.msra.mxu0 0.0
    %244 = vmatprep.subr.mxu0 0.0
    %245 = vmatpush2.msra.mxu0 0.0
    %246 = vmatprep.subr.mxu0 0.0
    %247 = vmatpush2.msra.mxu0 0.0
    %248 = vmatprep.subr.mxu0 0.0
    %249 = vmatpush2.msra.mxu0 0.0
    %250 = vmatprep.subr.mxu0 0.0
    %251 = vmatpush2.msra.mxu0 0.0
    %252 = vmatprep.subr.mxu0 0.0
    %253 = vmatpush2.msra.mxu0 0.0
    %254 = vmatprep.subr.mxu0 0.0
    %255 = vmatpush2.msra.mxu0 0.0
    %256 = vmatprep.subr.mxu0 0.0
    %257 = vmatpush2.msra.mxu0 0.0
    %258 = vmatprep.subr.mxu0 0.0
    %259 = vmatpush2.msra.mxu0 0.0
    %260 = vmatprep.subr.mxu0 0.0
    %261 = vmatpush2.msra.mxu0 0.0
    %262 = vmatprep.mubr.f32.mxu0 0.0
    %263 = vmatmul.mubr.f32.gmra.mxu0 %v196
    %v264 = vpop.f32.mrf.mxu0
    %v265 = vadd.f32 0.0, %v264
    %v266 = vpop.f32.mrf.mxu0
    %267 = vdwg.mxu0
    %v268 = vadd.f32 %v187, %v265
    %v269 = vxor.u32 %v268, 2147483648
    %v270 = vmul.f32 %v269, 1.442695
    %v271 = vpow.pop %v270
    %v272 = vadd.f32 %v271, 1.0
    %v273 = vrcp.pop %v272
    %v274 = vmul.f32 1.0, %v273
    %v275 = vtanh.pop %v268
    %v276 = vmul.f32 %v274, 0.0
    %278 = vrot.lane.b32.xlu0 %v275, 64
    %v279 = vpop.permute.xlu0 %278
    %v281 = vmul.f32 %v274, %v279
    %283 = vrot.lane.b32.xlu0 %v281, 32
    %v284 = vpop.permute.xlu0 %283
    %v286 = vadd.f32 %v276, %v284
    %v287 = vtanh.pop %v286
    %289 = vrot.lane.b32.xlu0 %v287, 64
    %v290 = vpop.permute.xlu0 %289
    %v292 = vmul.f32 %v274, %v290
    %294 = vrot.lane.b32.xlu0 %v292, 32
    %v295 = vpop.permute.xlu0 %294
    %v296 = vsel %vm113, %v295, 0
    %298 = vmatprep.subr.mxu0 0.0
    %299 = vmatpush1.msra.mxu0 0.0
    %300 = vmatprep.subr.mxu0 0.0
    %301 = vmatpush1.msra.mxu0 0.0
    %302 = vmatprep.subr.mxu0 0.0
    %303 = vmatpush1.msra.mxu0 0.0
    %304 = vmatprep.subr.mxu0 0.0
    %305 = vmatpush1.msra.mxu0 0.0
    %306 = vmatprep.subr.mxu0 0.0
    %307 = vmatpush1.msra.mxu0 0.0
    %308 = vmatprep.subr.mxu0 0.0
    %309 = vmatpush1.msra.mxu0 0.0
    %310 = vmatprep.subr.mxu0 0.0
    %311 = vmatpush1.msra.mxu0 0.0
    %312 = vmatprep.subr.mxu0 0.0
    %313 = vmatpush1.msra.mxu0 0.0
    %314 = vmatprep.subr.mxu0 0.0
    %315 = vmatpush1.msra.mxu0 0.0
    %316 = vmatprep.subr.mxu0 0.0
    %317 = vmatpush1.msra.mxu0 0.0
    %318 = vmatprep.subr.mxu0 0.0
    %319 = vmatpush1.msra.mxu0 0.0
    %320 = vmatprep.subr.mxu0 0.0
    %321 = vmatpush1.msra.mxu0 0.0
    %322 = vmatprep.subr.mxu0 0.0
    %323 = vmatpush1.msra.mxu0 %v98
    %324 = vmatprep.subr.mxu0 0.0
    %325 = vmatpush1.msra.mxu0 %v97
    %326 = vmatprep.subr.mxu0 0.0
    %327 = vmatpush1.msra.mxu0 %v96
    %328 = vmatprep.subr.mxu0 0.0
    %329 = vmatpush1.msra.mxu0 %v95
    %330 = vmatprep.subr.mxu0 0.0
    %331 = vmatpush2.msra.mxu0 0.0
    %332 = vmatprep.subr.mxu0 0.0
    %333 = vmatpush2.msra.mxu0 0.0
    %334 = vmatprep.subr.mxu0 0.0
    %335 = vmatpush2.msra.mxu0 0.0
    %336 = vmatprep.subr.mxu0 0.0
    %337 = vmatpush2.msra.mxu0 0.0
    %338 = vmatprep.subr.mxu0 0.0
    %339 = vmatpush2.msra.mxu0 0.0
    %340 = vmatprep.subr.mxu0 0.0
    %341 = vmatpush2.msra.mxu0 0.0
    %342 = vmatprep.subr.mxu0 0.0
    %343 = vmatpush2.msra.mxu0 0.0
    %344 = vmatprep.subr.mxu0 0.0
    %345 = vmatpush2.msra.mxu0 0.0
    %346 = vmatprep.subr.mxu0 0.0
    %347 = vmatpush2.msra.mxu0 0.0
    %348 = vmatprep.subr.mxu0 0.0
    %349 = vmatpush2.msra.mxu0 0.0
    %350 = vmatprep.subr.mxu0 0.0
    %351 = vmatpush2.msra.mxu0 0.0
    %352 = vmatprep.subr.mxu0 0.0
    %353 = vmatpush2.msra.mxu0 0.0
    %354 = vmatprep.subr.mxu0 0.0
    %355 = vmatpush2.msra.mxu0 0.0
    %356 = vmatprep.subr.mxu0 0.0
    %357 = vmatpush2.msra.mxu0 0.0
    %358 = vmatprep.subr.mxu0 0.0
    %359 = vmatpush2.msra.mxu0 0.0
    %360 = vmatprep.subr.mxu0 0.0
    %361 = vmatpush2.msra.mxu0 0.0
    %362 = vmatprep.mubr.f32.mxu0 0.0
    %363 = vmatmul.mubr.f32.gmra.mxu0 %v296
    %v364 = vpop.f32.mrf.mxu0
    %v365 = vadd.f32 0.0, %v364
    %v366 = vpop.f32.mrf.mxu0
    %367 = vdwg.mxu0
    %v369 = vrot.slane %v365, 6
    %v371 = vadd.f32 %v187, %v369
    %v372 = vxor.u32 %v371, 2147483648
    %v373 = vmul.f32 %v372, 1.442695
    %v374 = vpow.pop %v373
    %v375 = vadd.f32 %v374, 1.0
    %v376 = vrcp.pop %v375
    %v377 = vmul.f32 1.0, %v376
    %v378 = vtanh.pop %v371
    %v380 = vrot.slane %v286, 6
    %v382 = vmul.f32 %v377, %v380
    %384 = vrot.lane.b32.xlu0 %v378, 64
    %v385 = vpop.permute.xlu0 %384
    %v387 = vmul.f32 %v377, %v385
    %389 = vrot.lane.b32.xlu0 %v387, 32
    %v390 = vpop.permute.xlu0 %389
    %v392 = vadd.f32 %v382, %v390
    %v393 = vtanh.pop %v392
    %395 = vrot.lane.b32.xlu0 %v393, 64
    %v396 = vpop.permute.xlu0 %395
    %v398 = vmul.f32 %v377, %v396
    %v400 = vlaneseq
    %v401 = vshrl.u32 %v400, 7
    %v402 = vsub.s32 0, %v401
    %v403 = vrot.slane %v104, %v402
    %405 = vmatprep.subr.mxu0 0.0
    %406 = vmatpush1.msra.mxu0 0.0
    %407 = vmatprep.subr.mxu0 0.0
    %408 = vmatpush1.msra.mxu0 0.0
    %409 = vmatprep.subr.mxu0 0.0
    %410 = vmatpush1.msra.mxu0 0.0
    %411 = vmatprep.subr.mxu0 0.0
    %412 = vmatpush1.msra.mxu0 0.0
    %413 = vmatprep.subr.mxu0 0.0
    %414 = vmatpush1.msra.mxu0 0.0
    %415 = vmatprep.subr.mxu0 0.0
    %416 = vmatpush1.msra.mxu0 0.0
    %417 = vmatprep.subr.mxu0 0.0
    %418 = vmatpush1.msra.mxu0 0.0
    %419 = vmatprep.subr.mxu0 0.0
    %420 = vmatpush1.msra.mxu0 0.0
    %421 = vmatprep.subr.mxu0 0.0
    %422 = vmatpush1.msra.mxu0 0.0
    %423 = vmatprep.subr.mxu0 0.0
    %424 = vmatpush1.msra.mxu0 0.0
    %425 = vmatprep.subr.mxu0 0.0
    %426 = vmatpush1.msra.mxu0 0.0
    %427 = vmatprep.subr.mxu0 0.0
    %428 = vmatpush1.msra.mxu0 0.0
    %429 = vmatprep.subr.mxu0 0.0
    %430 = vmatpush1.msra.mxu0 %v94
    %431 = vmatprep.subr.mxu0 0.0
    %432 = vmatpush1.msra.mxu0 %v93
    %433 = vmatprep.subr.mxu0 0.0
    %434 = vmatpush1.msra.mxu0 %v92
    %435 = vmatprep.subr.mxu0 0.0
    %436 = vmatpush1.msra.mxu0 %v91
    %437 = vmatprep.subr.mxu0 0.0
    %438 = vmatpush2.msra.mxu0 0.0
    %439 = vmatprep.subr.mxu0 0.0
    %440 = vmatpush2.msra.mxu0 0.0
    %441 = vmatprep.subr.mxu0 0.0
    %442 = vmatpush2.msra.mxu0 0.0
    %443 = vmatprep.subr.mxu0 0.0
    %444 = vmatpush2.msra.mxu0 0.0
    %445 = vmatprep.subr.mxu0 0.0
    %446 = vmatpush2.msra.mxu0 0.0
    %447 = vmatprep.subr.mxu0 0.0
    %448 = vmatpush2.msra.mxu0 0.0
    %449 = vmatprep.subr.mxu0 0.0
    %450 = vmatpush2.msra.mxu0 0.0
    %451 = vmatprep.subr.mxu0 0.0
    %452 = vmatpush2.msra.mxu0 0.0
    %453 = vmatprep.subr.mxu0 0.0
    %454 = vmatpush2.msra.mxu0 0.0
    %455 = vmatprep.subr.mxu0 0.0
    %456 = vmatpush2.msra.mxu0 0.0
    %457 = vmatprep.subr.mxu0 0.0
    %458 = vmatpush2.msra.mxu0 0.0
    %459 = vmatprep.subr.mxu0 0.0
    %460 = vmatpush2.msra.mxu0 0.0
    %461 = vmatprep.subr.mxu0 0.0
    %462 = vmatpush2.msra.mxu0 0.0
    %463 = vmatprep.subr.mxu0 0.0
    %464 = vmatpush2.msra.mxu0 0.0
    %465 = vmatprep.subr.mxu0 0.0
    %466 = vmatpush2.msra.mxu0 0.0
    %467 = vmatprep.subr.mxu0 0.0
    %468 = vmatpush2.msra.mxu0 0.0
    %469 = vmatprep.mubr.f32.mxu0 0.0
    %470 = vmatmul.mubr.f32.gmra.mxu0 %v296
    %v471 = vpop.f32.mrf.mxu0
    %v472 = vadd.f32 %v403, %v471
    %v473 = vpop.f32.mrf.mxu0
    %474 = vdwg.mxu0
    %475 = vmatprep.subr.mxu0 0.0
    %476 = vmatpush1.msra.mxu0 0.0
    %477 = vmatprep.subr.mxu0 0.0
    %478 = vmatpush1.msra.mxu0 0.0
    %479 = vmatprep.subr.mxu0 0.0
    %480 = vmatpush1.msra.mxu0 0.0
    %481 = vmatprep.subr.mxu0 0.0
    %482 = vmatpush1.msra.mxu0 0.0
    %483 = vmatprep.subr.mxu0 0.0
    %484 = vmatpush1.msra.mxu0 0.0
    %485 = vmatprep.subr.mxu0 0.0
    %486 = vmatpush1.msra.mxu0 0.0
    %487 = vmatprep.subr.mxu0 0.0
    %488 = vmatpush1.msra.mxu0 0.0
    %489 = vmatprep.subr.mxu0 0.0
    %490 = vmatpush1.msra.mxu0 0.0
    %491 = vmatprep.subr.mxu0 0.0
    %492 = vmatpush1.msra.mxu0 0.0
    %493 = vmatprep.subr.mxu0 0.0
    %494 = vmatpush1.msra.mxu0 0.0
    %495 = vmatprep.subr.mxu0 0.0
    %496 = vmatpush1.msra.mxu0 0.0
    %497 = vmatprep.subr.mxu0 0.0
    %498 = vmatpush1.msra.mxu0 0.0
    %499 = vmatprep.subr.mxu0 0.0
    %500 = vmatpush1.msra.mxu0 %v102
    %501 = vmatprep.subr.mxu0 0.0
    %502 = vmatpush1.msra.mxu0 %v101
    %503 = vmatprep.subr.mxu0 0.0
    %504 = vmatpush1.msra.mxu0 %v100
    %505 = vmatprep.subr.mxu0 0.0
    %506 = vmatpush1.msra.mxu0 %v99
    %507 = vmatprep.subr.mxu0 0.0
    %508 = vmatpush2.msra.mxu0 0.0
    %509 = vmatprep.subr.mxu0 0.0
    %510 = vmatpush2.msra.mxu0 0.0
    %511 = vmatprep.subr.mxu0 0.0
    %512 = vmatpush2.msra.mxu0 0.0
    %513 = vmatprep.subr.mxu0 0.0
    %514 = vmatpush2.msra.mxu0 0.0
    %515 = vmatprep.subr.mxu0 0.0
    %516 = vmatpush2.msra.mxu0 0.0
    %517 = vmatprep.subr.mxu0 0.0
    %518 = vmatpush2.msra.mxu0 0.0
    %519 = vmatprep.subr.mxu0 0.0
    %520 = vmatpush2.msra.mxu0 0.0
    %521 = vmatprep.subr.mxu0 0.0
    %522 = vmatpush2.msra.mxu0 0.0
    %523 = vmatprep.subr.mxu0 0.0
    %524 = vmatpush2.msra.mxu0 0.0
    %525 = vmatprep.subr.mxu0 0.0
    %526 = vmatpush2.msra.mxu0 0.0
    %527 = vmatprep.subr.mxu0 0.0
    %528 = vmatpush2.msra.mxu0 0.0
    %529 = vmatprep.subr.mxu0 0.0
    %530 = vmatpush2.msra.mxu0 0.0
    %531 = vmatprep.subr.mxu0 0.0
    %532 = vmatpush2.msra.mxu0 0.0
    %533 = vmatprep.subr.mxu0 0.0
    %534 = vmatpush2.msra.mxu0 0.0
    %535 = vmatprep.subr.mxu0 0.0
    %536 = vmatpush2.msra.mxu0 0.0
    %537 = vmatprep.subr.mxu0 0.0
    %538 = vmatpush2.msra.mxu0 0.0
    %539 = vmatprep.mubr.f32.mxu0 0.0
    %540 = vmatmul.mubr.f32.gmra.mxu0 %v196
    %v541 = vpop.f32.mrf.mxu0
    %v542 = vadd.f32 0.0, %v541
    %v543 = vpop.f32.mrf.mxu0
    %544 = vdwg.mxu0
    %v545 = vadd.f32 %v472, %v542
    %v546 = vxor.u32 %v545, 2147483648
    %v547 = vmul.f32 %v546, 1.442695
    %v548 = vpow.pop %v547
    %v549 = vadd.f32 %v548, 1.0
    %v550 = vrcp.pop %v549
    %v551 = vmul.f32 1.0, %v550
    %v552 = vtanh.pop %v545
    %v553 = vmul.f32 %v551, 0.0
    %555 = vrot.lane.b32.xlu0 %v552, 64
    %v556 = vpop.permute.xlu0 %555
    %v558 = vmul.f32 %v551, %v556
    %560 = vrot.lane.b32.xlu0 %v558, 32
    %v561 = vpop.permute.xlu0 %560
    %v563 = vadd.f32 %v553, %v561
    %v564 = vtanh.pop %v563
    %566 = vrot.lane.b32.xlu0 %v564, 64
    %v567 = vpop.permute.xlu0 %566
    %v569 = vmul.f32 %v551, %v567
    %v571 = vrot.slane %v398, 2
    %572 = vrot.lane.b32.xlu0 %v571, 32
    %v573 = vpop.permute.xlu0 %572
    %v574 = vsel %vm113, %v573, 0
    %576 = vmatprep.subr.mxu0 0.0
    %577 = vmatpush1.msra.mxu0 0.0
    %578 = vmatprep.subr.mxu0 0.0
    %579 = vmatpush1.msra.mxu0 0.0
    %580 = vmatprep.subr.mxu0 0.0
    %581 = vmatpush1.msra.mxu0 0.0
    %582 = vmatprep.subr.mxu0 0.0
    %583 = vmatpush1.msra.mxu0 0.0
    %584 = vmatprep.subr.mxu0 0.0
    %585 = vmatpush1.msra.mxu0 0.0
    %586 = vmatprep.subr.mxu0 0.0
    %587 = vmatpush1.msra.mxu0 0.0
    %588 = vmatprep.subr.mxu0 0.0
    %589 = vmatpush1.msra.mxu0 0.0
    %590 = vmatprep.subr.mxu0 0.0
    %591 = vmatpush1.msra.mxu0 0.0
    %592 = vmatprep.subr.mxu0 0.0
    %593 = vmatpush1.msra.mxu0 0.0
    %594 = vmatprep.subr.mxu0 0.0
    %595 = vmatpush1.msra.mxu0 0.0
    %596 = vmatprep.subr.mxu0 0.0
    %597 = vmatpush1.msra.mxu0 0.0
    %598 = vmatprep.subr.mxu0 0.0
    %599 = vmatpush1.msra.mxu0 0.0
    %600 = vmatprep.subr.mxu0 0.0
    %601 = vmatpush1.msra.mxu0 %v98
    %602 = vmatprep.subr.mxu0 0.0
    %603 = vmatpush1.msra.mxu0 %v97
    %604 = vmatprep.subr.mxu0 0.0
    %605 = vmatpush1.msra.mxu0 %v96
    %606 = vmatprep.subr.mxu0 0.0
    %607 = vmatpush1.msra.mxu0 %v95
    %608 = vmatprep.subr.mxu0 0.0
    %609 = vmatpush2.msra.mxu0 0.0
    %610 = vmatprep.subr.mxu0 0.0
    %611 = vmatpush2.msra.mxu0 0.0
    %612 = vmatprep.subr.mxu0 0.0
    %613 = vmatpush2.msra.mxu0 0.0
    %614 = vmatprep.subr.mxu0 0.0
    %615 = vmatpush2.msra.mxu0 0.0
    %616 = vmatprep.subr.mxu0 0.0
    %617 = vmatpush2.msra.mxu0 0.0
    %618 = vmatprep.subr.mxu0 0.0
    %619 = vmatpush2.msra.mxu0 0.0
    %620 = vmatprep.subr.mxu0 0.0
    %621 = vmatpush2.msra.mxu0 0.0
    %622 = vmatprep.subr.mxu0 0.0
    %623 = vmatpush2.msra.mxu0 0.0
    %624 = vmatprep.subr.mxu0 0.0
    %625 = vmatpush2.msra.mxu0 0.0
    %626 = vmatprep.subr.mxu0 0.0
    %627 = vmatpush2.msra.mxu0 0.0
    %628 = vmatprep.subr.mxu0 0.0
    %629 = vmatpush2.msra.mxu0 0.0
    %630 = vmatprep.subr.mxu0 0.0
    %631 = vmatpush2.msra.mxu0 0.0
    %632 = vmatprep.subr.mxu0 0.0
    %633 = vmatpush2.msra.mxu0 0.0
    %634 = vmatprep.subr.mxu0 0.0
    %635 = vmatpush2.msra.mxu0 0.0
    %636 = vmatprep.subr.mxu0 0.0
    %637 = vmatpush2.msra.mxu0 0.0
    %638 = vmatprep.subr.mxu0 0.0
    %639 = vmatpush2.msra.mxu0 0.0
    %640 = vmatprep.mubr.f32.mxu0 0.0
    %641 = vmatmul.mubr.f32.gmra.mxu0 %v574
    %v642 = vpop.f32.mrf.mxu0
    %v643 = vadd.f32 0.0, %v642
    %v644 = vpop.f32.mrf.mxu0
    %645 = vdwg.mxu0
    %v647 = vrot.slane %v643, 4
    %v649 = vadd.f32 %v187, %v647
    %v650 = vxor.u32 %v649, 2147483648
    %v651 = vmul.f32 %v650, 1.442695
    %v652 = vpow.pop %v651
    %v653 = vadd.f32 %v652, 1.0
    %v654 = vrcp.pop %v653
    %v655 = vmul.f32 1.0, %v654
    %v656 = vtanh.pop %v649
    %v658 = vrot.slane %v392, 6
    %v660 = vmul.f32 %v655, %v658
    %662 = vrot.lane.b32.xlu0 %v656, 64
    %v663 = vpop.permute.xlu0 %662
    %v665 = vmul.f32 %v655, %v663
    %667 = vrot.lane.b32.xlu0 %v665, 32
    %v668 = vpop.permute.xlu0 %667
    %v670 = vadd.f32 %v660, %v668
    %v671 = vtanh.pop %v670
    %673 = vrot.lane.b32.xlu0 %v671, 64
    %v674 = vpop.permute.xlu0 %673
    %v676 = vmul.f32 %v655, %v674
    %677 = vmatprep.subr.mxu0 0.0
    %678 = vmatpush1.msra.mxu0 0.0
    %679 = vmatprep.subr.mxu0 0.0
    %680 = vmatpush1.msra.mxu0 0.0
    %681 = vmatprep.subr.mxu0 0.0
    %682 = vmatpush1.msra.mxu0 0.0
    %683 = vmatprep.subr.mxu0 0.0
    %684 = vmatpush1.msra.mxu0 0.0
    %685 = vmatprep.subr.mxu0 0.0
    %686 = vmatpush1.msra.mxu0 0.0
    %687 = vmatprep.subr.mxu0 0.0
    %688 = vmatpush1.msra.mxu0 0.0
    %689 = vmatprep.subr.mxu0 0.0
    %690 = vmatpush1.msra.mxu0 0.0
    %691 = vmatprep.subr.mxu0 0.0
    %692 = vmatpush1.msra.mxu0 0.0
    %693 = vmatprep.subr.mxu0 0.0
    %694 = vmatpush1.msra.mxu0 0.0
    %695 = vmatprep.subr.mxu0 0.0
    %696 = vmatpush1.msra.mxu0 0.0
    %697 = vmatprep.subr.mxu0 0.0
    %698 = vmatpush1.msra.mxu0 0.0
    %699 = vmatprep.subr.mxu0 0.0
    %700 = vmatpush1.msra.mxu0 0.0
    %701 = vmatprep.subr.mxu0 0.0
    %702 = vmatpush1.msra.mxu0 %v94
    %703 = vmatprep.subr.mxu0 0.0
    %704 = vmatpush1.msra.mxu0 %v93
    %705 = vmatprep.subr.mxu0 0.0
    %706 = vmatpush1.msra.mxu0 %v92
    %707 = vmatprep.subr.mxu0 0.0
    %708 = vmatpush1.msra.mxu0 %v91
    %709 = vmatprep.subr.mxu0 0.0
    %710 = vmatpush2.msra.mxu0 0.0
    %711 = vmatprep.subr.mxu0 0.0
    %712 = vmatpush2.msra.mxu0 0.0
    %713 = vmatprep.subr.mxu0 0.0
    %714 = vmatpush2.msra.mxu0 0.0
    %715 = vmatprep.subr.mxu0 0.0
    %716 = vmatpush2.msra.mxu0 0.0
    %717 = vmatprep.subr.mxu0 0.0
    %718 = vmatpush2.msra.mxu0 0.0
    %719 = vmatprep.subr.mxu0 0.0
    %720 = vmatpush2.msra.mxu0 0.0
    %721 = vmatprep.subr.mxu0 0.0
    %722 = vmatpush2.msra.mxu0 0.0
    %723 = vmatprep.subr.mxu0 0.0
    %724 = vmatpush2.msra.mxu0 0.0
    %725 = vmatprep.subr.mxu0 0.0
    %726 = vmatpush2.msra.mxu0 0.0
    %727 = vmatprep.subr.mxu0 0.0
    %728 = vmatpush2.msra.mxu0 0.0
    %729 = vmatprep.subr.mxu0 0.0
    %730 = vmatpush2.msra.mxu0 0.0
    %731 = vmatprep.subr.mxu0 0.0
    %732 = vmatpush2.msra.mxu0 0.0
    %733 = vmatprep.subr.mxu0 0.0
    %734 = vmatpush2.msra.mxu0 0.0
    %735 = vmatprep.subr.mxu0 0.0
    %736 = vmatpush2.msra.mxu0 0.0
    %737 = vmatprep.subr.mxu0 0.0
    %738 = vmatpush2.msra.mxu0 0.0
    %739 = vmatprep.subr.mxu0 0.0
    %740 = vmatpush2.msra.mxu0 0.0
    %741 = vmatprep.mubr.f32.mxu0 0.0
    %742 = vmatmul.mubr.f32.gmra.mxu0 %v574
    %v743 = vpop.f32.mrf.mxu0
    %v744 = vadd.f32 %v403, %v743
    %v745 = vpop.f32.mrf.mxu0
    %746 = vdwg.mxu0
    %748 = vrot.lane.b32.xlu0 %v569, 32
    %v749 = vpop.permute.xlu0 %748
    %v750 = vsel %vm113, %v749, 0
    %752 = vmatprep.subr.mxu0 0.0
    %753 = vmatpush1.msra.mxu0 0.0
    %754 = vmatprep.subr.mxu0 0.0
    %755 = vmatpush1.msra.mxu0 0.0
    %756 = vmatprep.subr.mxu0 0.0
    %757 = vmatpush1.msra.mxu0 0.0
    %758 = vmatprep.subr.mxu0 0.0
    %759 = vmatpush1.msra.mxu0 0.0
    %760 = vmatprep.subr.mxu0 0.0
    %761 = vmatpush1.msra.mxu0 0.0
    %762 = vmatprep.subr.mxu0 0.0
    %763 = vmatpush1.msra.mxu0 0.0
    %764 = vmatprep.subr.mxu0 0.0
    %765 = vmatpush1.msra.mxu0 0.0
    %766 = vmatprep.subr.mxu0 0.0
    %767 = vmatpush1.msra.mxu0 0.0
    %768 = vmatprep.subr.mxu0 0.0
    %769 = vmatpush1.msra.mxu0 0.0
    %770 = vmatprep.subr.mxu0 0.0
    %771 = vmatpush1.msra.mxu0 0.0
    %772 = vmatprep.subr.mxu0 0.0
    %773 = vmatpush1.msra.mxu0 0.0
    %774 = vmatprep.subr.mxu0 0.0
    %775 = vmatpush1.msra.mxu0 0.0
    %776 = vmatprep.subr.mxu0 0.0
    %777 = vmatpush1.msra.mxu0 %v102
    %778 = vmatprep.subr.mxu0 0.0
    %779 = vmatpush1.msra.mxu0 %v101
    %780 = vmatprep.subr.mxu0 0.0
    %781 = vmatpush1.msra.mxu0 %v100
    %782 = vmatprep.subr.mxu0 0.0
    %783 = vmatpush1.msra.mxu0 %v99
    %784 = vmatprep.subr.mxu0 0.0
    %785 = vmatpush2.msra.mxu0 0.0
    %786 = vmatprep.subr.mxu0 0.0
    %787 = vmatpush2.msra.mxu0 0.0
    %788 = vmatprep.subr.mxu0 0.0
    %789 = vmatpush2.msra.mxu0 0.0
    %790 = vmatprep.subr.mxu0 0.0
    %791 = vmatpush2.msra.mxu0 0.0
    %792 = vmatprep.subr.mxu0 0.0
    %793 = vmatpush2.msra.mxu0 0.0
    %794 = vmatprep.subr.mxu0 0.0
    %795 = vmatpush2.msra.mxu0 0.0
    %796 = vmatprep.subr.mxu0 0.0
    %797 = vmatpush2.msra.mxu0 0.0
    %798 = vmatprep.subr.mxu0 0.0
    %799 = vmatpush2.msra.mxu0 0.0
    %800 = vmatprep.subr.mxu0 0.0
    %801 = vmatpush2.msra.mxu0 0.0
    %802 = vmatprep.subr.mxu0 0.0
    %803 = vmatpush2.msra.mxu0 0.0
    %804 = vmatprep.subr.mxu0 0.0
    %805 = vmatpush2.msra.mxu0 0.0
    %806 = vmatprep.subr.mxu0 0.0
    %807 = vmatpush2.msra.mxu0 0.0
    %808 = vmatprep.subr.mxu0 0.0
    %809 = vmatpush2.msra.mxu0 0.0
    %810 = vmatprep.subr.mxu0 0.0
    %811 = vmatpush2.msra.mxu0 0.0
    %812 = vmatprep.subr.mxu0 0.0
    %813 = vmatpush2.msra.mxu0 0.0
    %814 = vmatprep.subr.mxu0 0.0
    %815 = vmatpush2.msra.mxu0 0.0
    %816 = vmatprep.mubr.f32.mxu0 0.0
    %817 = vmatmul.mubr.f32.gmra.mxu0 %v750
    %v818 = vpop.f32.mrf.mxu0
    %v819 = vadd.f32 0.0, %v818
    %v820 = vpop.f32.mrf.mxu0
    %821 = vdwg.mxu0
    %v822 = vadd.f32 %v744, %v819
    %v823 = vxor.u32 %v822, 2147483648
    %v824 = vmul.f32 %v823, 1.442695
    %v825 = vpow.pop %v824
    %v826 = vadd.f32 %v825, 1.0
    %v827 = vrcp.pop %v826
    %v828 = vmul.f32 1.0, %v827
    %v829 = vtanh.pop %v822
    %v830 = vmul.f32 %v828, %v563
    %832 = vrot.lane.b32.xlu0 %v829, 64
    %v833 = vpop.permute.xlu0 %832
    %v835 = vmul.f32 %v828, %v833
    %837 = vrot.lane.b32.xlu0 %v835, 32
    %v838 = vpop.permute.xlu0 %837
    %v840 = vadd.f32 %v830, %v838
    %v841 = vtanh.pop %v840
    %843 = vrot.lane.b32.xlu0 %v841, 64
    %v844 = vpop.permute.xlu0 %843
    %v846 = vmul.f32 %v828, %v844
    %v848 = vrot.slane %v676, 4
    %849 = vrot.lane.b32.xlu0 %v848, 32
    %v850 = vpop.permute.xlu0 %849
    %v851 = vsel %vm113, %v850, 0
    %853 = vmatprep.subr.mxu0 0.0
    %854 = vmatpush1.msra.mxu0 0.0
    %855 = vmatprep.subr.mxu0 0.0
    %856 = vmatpush1.msra.mxu0 0.0
    %857 = vmatprep.subr.mxu0 0.0
    %858 = vmatpush1.msra.mxu0 0.0
    %859 = vmatprep.subr.mxu0 0.0
    %860 = vmatpush1.msra.mxu0 0.0
    %861 = vmatprep.subr.mxu0 0.0
    %862 = vmatpush1.msra.mxu0 0.0
    %863 = vmatprep.subr.mxu0 0.0
    %864 = vmatpush1.msra.mxu0 0.0
    %865 = vmatprep.subr.mxu0 0.0
    %866 = vmatpush1.msra.mxu0 0.0
    %867 = vmatprep.subr.mxu0 0.0
    %868 = vmatpush1.msra.mxu0 0.0
    %869 = vmatprep.subr.mxu0 0.0
    %870 = vmatpush1.msra.mxu0 0.0
    %871 = vmatprep.subr.mxu0 0.0
    %872 = vmatpush1.msra.mxu0 0.0
    %873 = vmatprep.subr.mxu0 0.0
    %874 = vmatpush1.msra.mxu0 0.0
    %875 = vmatprep.subr.mxu0 0.0
    %876 = vmatpush1.msra.mxu0 0.0
    %877 = vmatprep.subr.mxu0 0.0
    %878 = vmatpush1.msra.mxu0 %v98
    %879 = vmatprep.subr.mxu0 0.0
    %880 = vmatpush1.msra.mxu0 %v97
    %881 = vmatprep.subr.mxu0 0.0
    %882 = vmatpush1.msra.mxu0 %v96
    %883 = vmatprep.subr.mxu0 0.0
    %884 = vmatpush1.msra.mxu0 %v95
    %885 = vmatprep.subr.mxu0 0.0
    %886 = vmatpush2.msra.mxu0 0.0
    %887 = vmatprep.subr.mxu0 0.0
    %888 = vmatpush2.msra.mxu0 0.0
    %889 = vmatprep.subr.mxu0 0.0
    %890 = vmatpush2.msra.mxu0 0.0
    %891 = vmatprep.subr.mxu0 0.0
    %892 = vmatpush2.msra.mxu0 0.0
    %893 = vmatprep.subr.mxu0 0.0
    %894 = vmatpush2.msra.mxu0 0.0
    %895 = vmatprep.subr.mxu0 0.0
    %896 = vmatpush2.msra.mxu0 0.0
    %897 = vmatprep.subr.mxu0 0.0
    %898 = vmatpush2.msra.mxu0 0.0
    %899 = vmatprep.subr.mxu0 0.0
    %900 = vmatpush2.msra.mxu0 0.0
    %901 = vmatprep.subr.mxu0 0.0
    %902 = vmatpush2.msra.mxu0 0.0
    %903 = vmatprep.subr.mxu0 0.0
    %904 = vmatpush2.msra.mxu0 0.0
    %905 = vmatprep.subr.mxu0 0.0
    %906 = vmatpush2.msra.mxu0 0.0
    %907 = vmatprep.subr.mxu0 0.0
    %908 = vmatpush2.msra.mxu0 0.0
    %909 = vmatprep.subr.mxu0 0.0
    %910 = vmatpush2.msra.mxu0 0.0
    %911 = vmatprep.subr.mxu0 0.0
    %912 = vmatpush2.msra.mxu0 0.0
    %913 = vmatprep.subr.mxu0 0.0
    %914 = vmatpush2.msra.mxu0 0.0
    %915 = vmatprep.subr.mxu0 0.0
    %916 = vmatpush2.msra.mxu0 0.0
    %917 = vmatprep.mubr.f32.mxu0 0.0
    %918 = vmatmul.mubr.f32.gmra.mxu0 %v851
    %v919 = vpop.f32.mrf.mxu0
    %v920 = vadd.f32 0.0, %v919
    %v921 = vpop.f32.mrf.mxu0
    %922 = vdwg.mxu0
    %v924 = vrot.slane %v920, 2
    %v926 = vadd.f32 %v187, %v924
    %v927 = vxor.u32 %v926, 2147483648
    %v928 = vmul.f32 %v927, 1.442695
    %v929 = vpow.pop %v928
    %v930 = vadd.f32 %v929, 1.0
    %v931 = vrcp.pop %v930
    %v932 = vmul.f32 1.0, %v931
    %v933 = vtanh.pop %v926
    %v935 = vrot.slane %v670, 6
    %v937 = vmul.f32 %v932, %v935
    %939 = vrot.lane.b32.xlu0 %v933, 64
    %v940 = vpop.permute.xlu0 %939
    %v942 = vmul.f32 %v932, %v940
    %944 = vrot.lane.b32.xlu0 %v942, 32
    %v945 = vpop.permute.xlu0 %944
    %v947 = vadd.f32 %v937, %v945
    %v948 = vtanh.pop %v947
    %950 = vrot.lane.b32.xlu0 %v948, 64
    %v951 = vpop.permute.xlu0 %950
    %v953 = vmul.f32 %v932, %v951
    %954 = vmatprep.subr.mxu0 0.0
    %955 = vmatpush1.msra.mxu0 0.0
    %956 = vmatprep.subr.mxu0 0.0
    %957 = vmatpush1.msra.mxu0 0.0
    %958 = vmatprep.subr.mxu0 0.0
    %959 = vmatpush1.msra.mxu0 0.0
    %960 = vmatprep.subr.mxu0 0.0
    %961 = vmatpush1.msra.mxu0 0.0
    %962 = vmatprep.subr.mxu0 0.0
    %963 = vmatpush1.msra.mxu0 0.0
    %964 = vmatprep.subr.mxu0 0.0
    %965 = vmatpush1.msra.mxu0 0.0
    %966 = vmatprep.subr.mxu0 0.0
    %967 = vmatpush1.msra.mxu0 0.0
    %968 = vmatprep.subr.mxu0 0.0
    %969 = vmatpush1.msra.mxu0 0.0
    %970 = vmatprep.subr.mxu0 0.0
    %971 = vmatpush1.msra.mxu0 0.0
    %972 = vmatprep.subr.mxu0 0.0
    %973 = vmatpush1.msra.mxu0 0.0
    %974 = vmatprep.subr.mxu0 0.0
    %975 = vmatpush1.msra.mxu0 0.0
    %976 = vmatprep.subr.mxu0 0.0
    %977 = vmatpush1.msra.mxu0 0.0
    %978 = vmatprep.subr.mxu0 0.0
    %979 = vmatpush1.msra.mxu0 %v94
    %980 = vmatprep.subr.mxu0 0.0
    %981 = vmatpush1.msra.mxu0 %v93
    %982 = vmatprep.subr.mxu0 0.0
    %983 = vmatpush1.msra.mxu0 %v92
    %984 = vmatprep.subr.mxu0 0.0
    %985 = vmatpush1.msra.mxu0 %v91
    %986 = vmatprep.subr.mxu0 0.0
    %987 = vmatpush2.msra.mxu0 0.0
    %988 = vmatprep.subr.mxu0 0.0
    %989 = vmatpush2.msra.mxu0 0.0
    %990 = vmatprep.subr.mxu0 0.0
    %991 = vmatpush2.msra.mxu0 0.0
    %992 = vmatprep.subr.mxu0 0.0
    %993 = vmatpush2.msra.mxu0 0.0
    %994 = vmatprep.subr.mxu0 0.0
    %995 = vmatpush2.msra.mxu0 0.0
    %996 = vmatprep.subr.mxu0 0.0
    %997 = vmatpush2.msra.mxu0 0.0
    %998 = vmatprep.subr.mxu0 0.0
    %999 = vmatpush2.msra.mxu0 0.0
    %1000 = vmatprep.subr.mxu0 0.0
    %1001 = vmatpush2.msra.mxu0 0.0
    %1002 = vmatprep.subr.mxu0 0.0
    %1003 = vmatpush2.msra.mxu0 0.0
    %1004 = vmatprep.subr.mxu0 0.0
    %1005 = vmatpush2.msra.mxu0 0.0
    %1006 = vmatprep.subr.mxu0 0.0
    %1007 = vmatpush2.msra.mxu0 0.0
    %1008 = vmatprep.subr.mxu0 0.0
    %1009 = vmatpush2.msra.mxu0 0.0
    %1010 = vmatprep.subr.mxu0 0.0
    %1011 = vmatpush2.msra.mxu0 0.0
    %1012 = vmatprep.subr.mxu0 0.0
    %1013 = vmatpush2.msra.mxu0 0.0
    %1014 = vmatprep.subr.mxu0 0.0
    %1015 = vmatpush2.msra.mxu0 0.0
    %1016 = vmatprep.subr.mxu0 0.0
    %1017 = vmatpush2.msra.mxu0 0.0
    %1018 = vmatprep.mubr.f32.mxu0 0.0
    %1019 = vmatmul.mubr.f32.gmra.mxu0 %v851
    %v1020 = vpop.f32.mrf.mxu0
    %v1021 = vadd.f32 %v403, %v1020
    %v1022 = vpop.f32.mrf.mxu0
    %1023 = vdwg.mxu0
    %1025 = vrot.lane.b32.xlu0 %v846, 32
    %v1026 = vpop.permute.xlu0 %1025
    %v1027 = vsel %vm113, %v1026, 0
    %1029 = vmatprep.subr.mxu0 0.0
    %1030 = vmatpush1.msra.mxu0 0.0
    %1031 = vmatprep.subr.mxu0 0.0
    %1032 = vmatpush1.msra.mxu0 0.0
    %1033 = vmatprep.subr.mxu0 0.0
    %1034 = vmatpush1.msra.mxu0 0.0
    %1035 = vmatprep.subr.mxu0 0.0
    %1036 = vmatpush1.msra.mxu0 0.0
    %1037 = vmatprep.subr.mxu0 0.0
    %1038 = vmatpush1.msra.mxu0 0.0
    %1039 = vmatprep.subr.mxu0 0.0
    %1040 = vmatpush1.msra.mxu0 0.0
    %1041 = vmatprep.subr.mxu0 0.0
    %1042 = vmatpush1.msra.mxu0 0.0
    %1043 = vmatprep.subr.mxu0 0.0
    %1044 = vmatpush1.msra.mxu0 0.0
    %1045 = vmatprep.subr.mxu0 0.0
    %1046 = vmatpush1.msra.mxu0 0.0
    %1047 = vmatprep.subr.mxu0 0.0
    %1048 = vmatpush1.msra.mxu0 0.0
    %1049 = vmatprep.subr.mxu0 0.0
    %1050 = vmatpush1.msra.mxu0 0.0
    %1051 = vmatprep.subr.mxu0 0.0
    %1052 = vmatpush1.msra.mxu0 0.0
    %1053 = vmatprep.subr.mxu0 0.0
    %1054 = vmatpush1.msra.mxu0 %v102
    %1055 = vmatprep.subr.mxu0 0.0
    %1056 = vmatpush1.msra.mxu0 %v101
    %1057 = vmatprep.subr.mxu0 0.0
    %1058 = vmatpush1.msra.mxu0 %v100
    %1059 = vmatprep.subr.mxu0 0.0
    %1060 = vmatpush1.msra.mxu0 %v99
    %1061 = vmatprep.subr.mxu0 0.0
    %1062 = vmatpush2.msra.mxu0 0.0
    %1063 = vmatprep.subr.mxu0 0.0
    %1064 = vmatpush2.msra.mxu0 0.0
    %1065 = vmatprep.subr.mxu0 0.0
    %1066 = vmatpush2.msra.mxu0 0.0
    %1067 = vmatprep.subr.mxu0 0.0
    %1068 = vmatpush2.msra.mxu0 0.0
    %1069 = vmatprep.subr.mxu0 0.0
    %1070 = vmatpush2.msra.mxu0 0.0
    %1071 = vmatprep.subr.mxu0 0.0
    %1072 = vmatpush2.msra.mxu0 0.0
    %1073 = vmatprep.subr.mxu0 0.0
    %1074 = vmatpush2.msra.mxu0 0.0
    %1075 = vmatprep.subr.mxu0 0.0
    %1076 = vmatpush2.msra.mxu0 0.0
    %1077 = vmatprep.subr.mxu0 0.0
    %1078 = vmatpush2.msra.mxu0 0.0
    %1079 = vmatprep.subr.mxu0 0.0
    %1080 = vmatpush2.msra.mxu0 0.0
    %1081 = vmatprep.subr.mxu0 0.0
    %1082 = vmatpush2.msra.mxu0 0.0
    %1083 = vmatprep.subr.mxu0 0.0
    %1084 = vmatpush2.msra.mxu0 0.0
    %1085 = vmatprep.subr.mxu0 0.0
    %1086 = vmatpush2.msra.mxu0 0.0
    %1087 = vmatprep.subr.mxu0 0.0
    %1088 = vmatpush2.msra.mxu0 0.0
    %1089 = vmatprep.subr.mxu0 0.0
    %1090 = vmatpush2.msra.mxu0 0.0
    %1091 = vmatprep.subr.mxu0 0.0
    %1092 = vmatpush2.msra.mxu0 0.0
    %1093 = vmatprep.mubr.f32.mxu0 0.0
    %1094 = vmatmul.mubr.f32.gmra.mxu0 %v1027
    %v1095 = vpop.f32.mrf.mxu0
    %v1096 = vadd.f32 0.0, %v1095
    %v1097 = vpop.f32.mrf.mxu0
    %1098 = vdwg.mxu0
    %v1099 = vadd.f32 %v1021, %v1096
    %v1100 = vxor.u32 %v1099, 2147483648
    %v1101 = vmul.f32 %v1100, 1.442695
    %v1102 = vpow.pop %v1101
    %v1103 = vadd.f32 %v1102, 1.0
    %v1104 = vrcp.pop %v1103
    %v1105 = vmul.f32 1.0, %v1104
    %v1106 = vtanh.pop %v1099
    %v1107 = vmul.f32 %v1105, %v840
    %1109 = vrot.lane.b32.xlu0 %v1106, 64
    %v1110 = vpop.permute.xlu0 %1109
    %v1112 = vmul.f32 %v1105, %v1110
    %1114 = vrot.lane.b32.xlu0 %v1112, 32
    %v1115 = vpop.permute.xlu0 %1114
    %v1117 = vadd.f32 %v1107, %v1115
    %v1118 = vtanh.pop %v1117
    %1120 = vrot.lane.b32.xlu0 %v1118, 64
    %v1121 = vpop.permute.xlu0 %1120
    %v1123 = vmul.f32 %v1105, %v1121
    %v1125 = vrot.slane %v953, 6
    %1126 = vrot.lane.b32.xlu0 %v1125, 32
    %v1127 = vpop.permute.xlu0 %1126
    %v1128 = vsel %vm113, %v1127, 0
    %1130 = vmatprep.subr.mxu0 0.0
    %1131 = vmatpush1.msra.mxu0 0.0
    %1132 = vmatprep.subr.mxu0 0.0
    %1133 = vmatpush1.msra.mxu0 0.0
    %1134 = vmatprep.subr.mxu0 0.0
    %1135 = vmatpush1.msra.mxu0 0.0
    %1136 = vmatprep.subr.mxu0 0.0
    %1137 = vmatpush1.msra.mxu0 0.0
    %1138 = vmatprep.subr.mxu0 0.0
    %1139 = vmatpush1.msra.mxu0 0.0
    %1140 = vmatprep.subr.mxu0 0.0
    %1141 = vmatpush1.msra.mxu0 0.0
    %1142 = vmatprep.subr.mxu0 0.0
    %1143 = vmatpush1.msra.mxu0 0.0
    %1144 = vmatprep.subr.mxu0 0.0
    %1145 = vmatpush1.msra.mxu0 0.0
    %1146 = vmatprep.subr.mxu0 0.0
    %1147 = vmatpush1.msra.mxu0 0.0
    %1148 = vmatprep.subr.mxu0 0.0
    %1149 = vmatpush1.msra.mxu0 0.0
    %1150 = vmatprep.subr.mxu0 0.0
    %1151 = vmatpush1.msra.mxu0 0.0
    %1152 = vmatprep.subr.mxu0 0.0
    %1153 = vmatpush1.msra.mxu0 0.0
    %1154 = vmatprep.subr.mxu0 0.0
    %1155 = vmatpush1.msra.mxu0 %v98
    %1156 = vmatprep.subr.mxu0 0.0
    %1157 = vmatpush1.msra.mxu0 %v97
    %1158 = vmatprep.subr.mxu0 0.0
    %1159 = vmatpush1.msra.mxu0 %v96
    %1160 = vmatprep.subr.mxu0 0.0
    %1161 = vmatpush1.msra.mxu0 %v95
    %1162 = vmatprep.subr.mxu0 0.0
    %1163 = vmatpush2.msra.mxu0 0.0
    %1164 = vmatprep.subr.mxu0 0.0
    %1165 = vmatpush2.msra.mxu0 0.0
    %1166 = vmatprep.subr.mxu0 0.0
    %1167 = vmatpush2.msra.mxu0 0.0
    %1168 = vmatprep.subr.mxu0 0.0
    %1169 = vmatpush2.msra.mxu0 0.0
    %1170 = vmatprep.subr.mxu0 0.0
    %1171 = vmatpush2.msra.mxu0 0.0
    %1172 = vmatprep.subr.mxu0 0.0
    %1173 = vmatpush2.msra.mxu0 0.0
    %1174 = vmatprep.subr.mxu0 0.0
    %1175 = vmatpush2.msra.mxu0 0.0
    %1176 = vmatprep.subr.mxu0 0.0
    %1177 = vmatpush2.msra.mxu0 0.0
    %1178 = vmatprep.subr.mxu0 0.0
    %1179 = vmatpush2.msra.mxu0 0.0
    %1180 = vmatprep.subr.mxu0 0.0
    %1181 = vmatpush2.msra.mxu0 0.0
    %1182 = vmatprep.subr.mxu0 0.0
    %1183 = vmatpush2.msra.mxu0 0.0
    %1184 = vmatprep.subr.mxu0 0.0
    %1185 = vmatpush2.msra.mxu0 0.0
    %1186 = vmatprep.subr.mxu0 0.0
    %1187 = vmatpush2.msra.mxu0 0.0
    %1188 = vmatprep.subr.mxu0 0.0
    %1189 = vmatpush2.msra.mxu0 0.0
    %1190 = vmatprep.subr.mxu0 0.0
    %1191 = vmatpush2.msra.mxu0 0.0
    %1192 = vmatprep.subr.mxu0 0.0
    %1193 = vmatpush2.msra.mxu0 0.0
    %1194 = vmatprep.mubr.f32.mxu0 0.0
    %1195 = vmatmul.mubr.f32.gmra.mxu0 %v1128
    %v1196 = vpop.f32.mrf.mxu0
    %v1197 = vadd.f32 0.0, %v1196
    %v1198 = vpop.f32.mrf.mxu0
    %1199 = vdwg.mxu0
    %v1200 = vadd.f32 %v192, %v1197
    %v1201 = vxor.u32 %v1200, 2147483648
    %v1202 = vmul.f32 %v1201, 1.442695
    %v1203 = vpow.pop %v1202
    %v1204 = vadd.f32 %v1203, 1.0
    %v1205 = vrcp.pop %v1204
    %v1206 = vmul.f32 1.0, %v1205
    %v1207 = vtanh.pop %v1200
    %v1209 = vrot.slane %v947, 6
    %v1211 = vmul.f32 %v1206, %v1209
    %1213 = vrot.lane.b32.xlu0 %v1207, 64
    %v1214 = vpop.permute.xlu0 %1213
    %v1216 = vmul.f32 %v1206, %v1214
    %1218 = vrot.lane.b32.xlu0 %v1216, 32
    %v1219 = vpop.permute.xlu0 %1218
    %v1221 = vadd.f32 %v1211, %v1219
    %v1222 = vtanh.pop %v1221
    %1224 = vrot.lane.b32.xlu0 %v1222, 64
    %v1225 = vpop.permute.xlu0 %1224
    %v1227 = vmul.f32 %v1206, %v1225
    %1228 = vmatprep.subr.mxu0 0.0
    %1229 = vmatpush1.msra.mxu0 0.0
    %1230 = vmatprep.subr.mxu0 0.0
    %1231 = vmatpush1.msra.mxu0 0.0
    %1232 = vmatprep.subr.mxu0 0.0
    %1233 = vmatpush1.msra.mxu0 0.0
    %1234 = vmatprep.subr.mxu0 0.0
    %1235 = vmatpush1.msra.mxu0 0.0
    %1236 = vmatprep.subr.mxu0 0.0
    %1237 = vmatpush1.msra.mxu0 0.0
    %1238 = vmatprep.subr.mxu0 0.0
    %1239 = vmatpush1.msra.mxu0 0.0
    %1240 = vmatprep.subr.mxu0 0.0
    %1241 = vmatpush1.msra.mxu0 0.0
    %1242 = vmatprep.subr.mxu0 0.0
    %1243 = vmatpush1.msra.mxu0 0.0
    %1244 = vmatprep.subr.mxu0 0.0
    %1245 = vmatpush1.msra.mxu0 0.0
    %1246 = vmatprep.subr.mxu0 0.0
    %1247 = vmatpush1.msra.mxu0 0.0
    %1248 = vmatprep.subr.mxu0 0.0
    %1249 = vmatpush1.msra.mxu0 0.0
    %1250 = vmatprep.subr.mxu0 0.0
    %1251 = vmatpush1.msra.mxu0 0.0
    %1252 = vmatprep.subr.mxu0 0.0
    %1253 = vmatpush1.msra.mxu0 %v94
    %1254 = vmatprep.subr.mxu0 0.0
    %1255 = vmatpush1.msra.mxu0 %v93
    %1256 = vmatprep.subr.mxu0 0.0
    %1257 = vmatpush1.msra.mxu0 %v92
    %1258 = vmatprep.subr.mxu0 0.0
    %1259 = vmatpush1.msra.mxu0 %v91
    %1260 = vmatprep.subr.mxu0 0.0
    %1261 = vmatpush2.msra.mxu0 0.0
    %1262 = vmatprep.subr.mxu0 0.0
    %1263 = vmatpush2.msra.mxu0 0.0
    %1264 = vmatprep.subr.mxu0 0.0
    %1265 = vmatpush2.msra.mxu0 0.0
    %1266 = vmatprep.subr.mxu0 0.0
    %1267 = vmatpush2.msra.mxu0 0.0
    %1268 = vmatprep.subr.mxu0 0.0
    %1269 = vmatpush2.msra.mxu0 0.0
    %1270 = vmatprep.subr.mxu0 0.0
    %1271 = vmatpush2.msra.mxu0 0.0
    %1272 = vmatprep.subr.mxu0 0.0
    %1273 = vmatpush2.msra.mxu0 0.0
    %1274 = vmatprep.subr.mxu0 0.0
    %1275 = vmatpush2.msra.mxu0 0.0
    %1276 = vmatprep.subr.mxu0 0.0
    %1277 = vmatpush2.msra.mxu0 0.0
    %1278 = vmatprep.subr.mxu0 0.0
    %1279 = vmatpush2.msra.mxu0 0.0
    %1280 = vmatprep.subr.mxu0 0.0
    %1281 = vmatpush2.msra.mxu0 0.0
    %1282 = vmatprep.subr.mxu0 0.0
    %1283 = vmatpush2.msra.mxu0 0.0
    %1284 = vmatprep.subr.mxu0 0.0
    %1285 = vmatpush2.msra.mxu0 0.0
    %1286 = vmatprep.subr.mxu0 0.0
    %1287 = vmatpush2.msra.mxu0 0.0
    %1288 = vmatprep.subr.mxu0 0.0
    %1289 = vmatpush2.msra.mxu0 0.0
    %1290 = vmatprep.subr.mxu0 0.0
    %1291 = vmatpush2.msra.mxu0 0.0
    %1292 = vmatprep.mubr.f32.mxu0 0.0
    %1293 = vmatmul.mubr.f32.gmra.mxu0 %v1128
    %v1294 = vpop.f32.mrf.mxu0
    %v1295 = vadd.f32 %v403, %v1294
    %v1296 = vpop.f32.mrf.mxu0
    %1297 = vdwg.mxu0
    %1299 = vrot.lane.b32.xlu0 %v1123, 32
    %v1300 = vpop.permute.xlu0 %1299
    %v1301 = vsel %vm113, %v1300, 0
    %1303 = vmatprep.subr.mxu0 0.0
    %1304 = vmatpush1.msra.mxu0 0.0
    %1305 = vmatprep.subr.mxu0 0.0
    %1306 = vmatpush1.msra.mxu0 0.0
    %1307 = vmatprep.subr.mxu0 0.0
    %1308 = vmatpush1.msra.mxu0 0.0
    %1309 = vmatprep.subr.mxu0 0.0
    %1310 = vmatpush1.msra.mxu0 0.0
    %1311 = vmatprep.subr.mxu0 0.0
    %1312 = vmatpush1.msra.mxu0 0.0
    %1313 = vmatprep.subr.mxu0 0.0
    %1314 = vmatpush1.msra.mxu0 0.0
    %1315 = vmatprep.subr.mxu0 0.0
    %1316 = vmatpush1.msra.mxu0 0.0
    %1317 = vmatprep.subr.mxu0 0.0
    %1318 = vmatpush1.msra.mxu0 0.0
    %1319 = vmatprep.subr.mxu0 0.0
    %1320 = vmatpush1.msra.mxu0 0.0
    %1321 = vmatprep.subr.mxu0 0.0
    %1322 = vmatpush1.msra.mxu0 0.0
    %1323 = vmatprep.subr.mxu0 0.0
    %1324 = vmatpush1.msra.mxu0 0.0
    %1325 = vmatprep.subr.mxu0 0.0
    %1326 = vmatpush1.msra.mxu0 0.0
    %1327 = vmatprep.subr.mxu0 0.0
    %1328 = vmatpush1.msra.mxu0 %v102
    %1329 = vmatprep.subr.mxu0 0.0
    %1330 = vmatpush1.msra.mxu0 %v101
    %1331 = vmatprep.subr.mxu0 0.0
    %1332 = vmatpush1.msra.mxu0 %v100
    %1333 = vmatprep.subr.mxu0 0.0
    %1334 = vmatpush1.msra.mxu0 %v99
    %1335 = vmatprep.subr.mxu0 0.0
    %1336 = vmatpush2.msra.mxu0 0.0
    %1337 = vmatprep.subr.mxu0 0.0
    %1338 = vmatpush2.msra.mxu0 0.0
    %1339 = vmatprep.subr.mxu0 0.0
    %1340 = vmatpush2.msra.mxu0 0.0
    %1341 = vmatprep.subr.mxu0 0.0
    %1342 = vmatpush2.msra.mxu0 0.0
    %1343 = vmatprep.subr.mxu0 0.0
    %1344 = vmatpush2.msra.mxu0 0.0
    %1345 = vmatprep.subr.mxu0 0.0
    %1346 = vmatpush2.msra.mxu0 0.0
    %1347 = vmatprep.subr.mxu0 0.0
    %1348 = vmatpush2.msra.mxu0 0.0
    %1349 = vmatprep.subr.mxu0 0.0
    %1350 = vmatpush2.msra.mxu0 0.0
    %1351 = vmatprep.subr.mxu0 0.0
    %1352 = vmatpush2.msra.mxu0 0.0
    %1353 = vmatprep.subr.mxu0 0.0
    %1354 = vmatpush2.msra.mxu0 0.0
    %1355 = vmatprep.subr.mxu0 0.0
    %1356 = vmatpush2.msra.mxu0 0.0
    %1357 = vmatprep.subr.mxu0 0.0
    %1358 = vmatpush2.msra.mxu0 0.0
    %1359 = vmatprep.subr.mxu0 0.0
    %1360 = vmatpush2.msra.mxu0 0.0
    %1361 = vmatprep.subr.mxu0 0.0
    %1362 = vmatpush2.msra.mxu0 0.0
    %1363 = vmatprep.subr.mxu0 0.0
    %1364 = vmatpush2.msra.mxu0 0.0
    %1365 = vmatprep.subr.mxu0 0.0
    %1366 = vmatpush2.msra.mxu0 0.0
    %1367 = vmatprep.mubr.f32.mxu0 0.0
    %1368 = vmatmul.mubr.f32.gmra.mxu0 %v1301
    %v1369 = vpop.f32.mrf.mxu0
    %v1370 = vadd.f32 0.0, %v1369
    %v1371 = vpop.f32.mrf.mxu0
    %1372 = vdwg.mxu0
    %v1373 = vadd.f32 %v1295, %v1370
    %v1374 = vxor.u32 %v1373, 2147483648
    %v1375 = vmul.f32 %v1374, 1.442695
    %v1376 = vpow.pop %v1375
    %v1377 = vadd.f32 %v1376, 1.0
    %v1378 = vrcp.pop %v1377
    %v1379 = vmul.f32 1.0, %v1378
    %v1380 = vtanh.pop %v1373
    %v1381 = vmul.f32 %v1379, %v1117
    %1383 = vrot.lane.b32.xlu0 %v1380, 64
    %v1384 = vpop.permute.xlu0 %1383
    %v1386 = vmul.f32 %v1379, %v1384
    %1388 = vrot.lane.b32.xlu0 %v1386, 32
    %v1389 = vpop.permute.xlu0 %1388
    %v1391 = vadd.f32 %v1381, %v1389
    %v1392 = vtanh.pop %v1391
    %1394 = vrot.lane.b32.xlu0 %v1392, 64
    %v1395 = vpop.permute.xlu0 %1394
    %v1397 = vmul.f32 %v1379, %v1395
    %1399 = vrot.lane.b32.xlu0 %v1227, 32
    %v1400 = vpop.permute.xlu0 %1399
    %v1401 = vsel %vm113, %v1400, 0
    %1403 = vmatprep.subr.mxu0 0.0
    %1404 = vmatpush1.msra.mxu0 0.0
    %1405 = vmatprep.subr.mxu0 0.0
    %1406 = vmatpush1.msra.mxu0 0.0
    %1407 = vmatprep.subr.mxu0 0.0
    %1408 = vmatpush1.msra.mxu0 0.0
    %1409 = vmatprep.subr.mxu0 0.0
    %1410 = vmatpush1.msra.mxu0 0.0
    %1411 = vmatprep.subr.mxu0 0.0
    %1412 = vmatpush1.msra.mxu0 0.0
    %1413 = vmatprep.subr.mxu0 0.0
    %1414 = vmatpush1.msra.mxu0 0.0
    %1415 = vmatprep.subr.mxu0 0.0
    %1416 = vmatpush1.msra.mxu0 0.0
    %1417 = vmatprep.subr.mxu0 0.0
    %1418 = vmatpush1.msra.mxu0 0.0
    %1419 = vmatprep.subr.mxu0 0.0
    %1420 = vmatpush1.msra.mxu0 0.0
    %1421 = vmatprep.subr.mxu0 0.0
    %1422 = vmatpush1.msra.mxu0 0.0
    %1423 = vmatprep.subr.mxu0 0.0
    %1424 = vmatpush1.msra.mxu0 0.0
    %1425 = vmatprep.subr.mxu0 0.0
    %1426 = vmatpush1.msra.mxu0 0.0
    %1427 = vmatprep.subr.mxu0 0.0
    %1428 = vmatpush1.msra.mxu0 %v98
    %1429 = vmatprep.subr.mxu0 0.0
    %1430 = vmatpush1.msra.mxu0 %v97
    %1431 = vmatprep.subr.mxu0 0.0
    %1432 = vmatpush1.msra.mxu0 %v96
    %1433 = vmatprep.subr.mxu0 0.0
    %1434 = vmatpush1.msra.mxu0 %v95
    %1435 = vmatprep.subr.mxu0 0.0
    %1436 = vmatpush2.msra.mxu0 0.0
    %1437 = vmatprep.subr.mxu0 0.0
    %1438 = vmatpush2.msra.mxu0 0.0
    %1439 = vmatprep.subr.mxu0 0.0
    %1440 = vmatpush2.msra.mxu0 0.0
    %1441 = vmatprep.subr.mxu0 0.0
    %1442 = vmatpush2.msra.mxu0 0.0
    %1443 = vmatprep.subr.mxu0 0.0
    %1444 = vmatpush2.msra.mxu0 0.0
    %1445 = vmatprep.subr.mxu0 0.0
    %1446 = vmatpush2.msra.mxu0 0.0
    %1447 = vmatprep.subr.mxu0 0.0
    %1448 = vmatpush2.msra.mxu0 0.0
    %1449 = vmatprep.subr.mxu0 0.0
    %1450 = vmatpush2.msra.mxu0 0.0
    %1451 = vmatprep.subr.mxu0 0.0
    %1452 = vmatpush2.msra.mxu0 0.0
    %1453 = vmatprep.subr.mxu0 0.0
    %1454 = vmatpush2.msra.mxu0 0.0
    %1455 = vmatprep.subr.mxu0 0.0
    %1456 = vmatpush2.msra.mxu0 0.0
    %1457 = vmatprep.subr.mxu0 0.0
    %1458 = vmatpush2.msra.mxu0 0.0
    %1459 = vmatprep.subr.mxu0 0.0
    %1460 = vmatpush2.msra.mxu0 0.0
    %1461 = vmatprep.subr.mxu0 0.0
    %1462 = vmatpush2.msra.mxu0 0.0
    %1463 = vmatprep.subr.mxu0 0.0
    %1464 = vmatpush2.msra.mxu0 0.0
    %1465 = vmatprep.subr.mxu0 0.0
    %1466 = vmatpush2.msra.mxu0 0.0
    %1467 = vmatprep.mubr.f32.mxu0 0.0
    %1468 = vmatmul.mubr.f32.gmra.mxu0 %v1401
    %v1469 = vpop.f32.mrf.mxu0
    %v1470 = vadd.f32 0.0, %v1469
    %v1471 = vpop.f32.mrf.mxu0
    %1472 = vdwg.mxu0
    %v1474 = vrot.slane %v1470, 6
    %v1476 = vadd.f32 %v192, %v1474
    %v1477 = vxor.u32 %v1476, 2147483648
    %v1478 = vmul.f32 %v1477, 1.442695
    %v1479 = vpow.pop %v1478
    %v1480 = vadd.f32 %v1479, 1.0
    %v1481 = vrcp.pop %v1480
    %v1482 = vmul.f32 1.0, %v1481
    %v1483 = vtanh.pop %v1476
    %v1485 = vrot.slane %v1221, 6
    %v1487 = vmul.f32 %v1482, %v1485
    %1489 = vrot.lane.b32.xlu0 %v1483, 64
    %v1490 = vpop.permute.xlu0 %1489
    %v1492 = vmul.f32 %v1482, %v1490
    %1494 = vrot.lane.b32.xlu0 %v1492, 32
    %v1495 = vpop.permute.xlu0 %1494
    %v1497 = vadd.f32 %v1487, %v1495
    %v1498 = vtanh.pop %v1497
    %1500 = vrot.lane.b32.xlu0 %v1498, 64
    %v1501 = vpop.permute.xlu0 %1500
    %v1503 = vmul.f32 %v1482, %v1501
    %1504 = vmatprep.subr.mxu0 0.0
    %1505 = vmatpush1.msra.mxu0 0.0
    %1506 = vmatprep.subr.mxu0 0.0
    %1507 = vmatpush1.msra.mxu0 0.0
    %1508 = vmatprep.subr.mxu0 0.0
    %1509 = vmatpush1.msra.mxu0 0.0
    %1510 = vmatprep.subr.mxu0 0.0
    %1511 = vmatpush1.msra.mxu0 0.0
    %1512 = vmatprep.subr.mxu0 0.0
    %1513 = vmatpush1.msra.mxu0 0.0
    %1514 = vmatprep.subr.mxu0 0.0
    %1515 = vmatpush1.msra.mxu0 0.0
    %1516 = vmatprep.subr.mxu0 0.0
    %1517 = vmatpush1.msra.mxu0 0.0
    %1518 = vmatprep.subr.mxu0 0.0
    %1519 = vmatpush1.msra.mxu0 0.0
    %1520 = vmatprep.subr.mxu0 0.0
    %1521 = vmatpush1.msra.mxu0 0.0
    %1522 = vmatprep.subr.mxu0 0.0
    %1523 = vmatpush1.msra.mxu0 0.0
    %1524 = vmatprep.subr.mxu0 0.0
    %1525 = vmatpush1.msra.mxu0 0.0
    %1526 = vmatprep.subr.mxu0 0.0
    %1527 = vmatpush1.msra.mxu0 0.0
    %1528 = vmatprep.subr.mxu0 0.0
    %1529 = vmatpush1.msra.mxu0 %v94
    %1530 = vmatprep.subr.mxu0 0.0
    %1531 = vmatpush1.msra.mxu0 %v93
    %1532 = vmatprep.subr.mxu0 0.0
    %1533 = vmatpush1.msra.mxu0 %v92
    %1534 = vmatprep.subr.mxu0 0.0
    %1535 = vmatpush1.msra.mxu0 %v91
    %1536 = vmatprep.subr.mxu0 0.0
    %1537 = vmatpush2.msra.mxu0 0.0
    %1538 = vmatprep.subr.mxu0 0.0
    %1539 = vmatpush2.msra.mxu0 0.0
    %1540 = vmatprep.subr.mxu0 0.0
    %1541 = vmatpush2.msra.mxu0 0.0
    %1542 = vmatprep.subr.mxu0 0.0
    %1543 = vmatpush2.msra.mxu0 0.0
    %1544 = vmatprep.subr.mxu0 0.0
    %1545 = vmatpush2.msra.mxu0 0.0
    %1546 = vmatprep.subr.mxu0 0.0
    %1547 = vmatpush2.msra.mxu0 0.0
    %1548 = vmatprep.subr.mxu0 0.0
    %1549 = vmatpush2.msra.mxu0 0.0
    %1550 = vmatprep.subr.mxu0 0.0
    %1551 = vmatpush2.msra.mxu0 0.0
    %1552 = vmatprep.subr.mxu0 0.0
    %1553 = vmatpush2.msra.mxu0 0.0
    %1554 = vmatprep.subr.mxu0 0.0
    %1555 = vmatpush2.msra.mxu0 0.0
    %1556 = vmatprep.subr.mxu0 0.0
    %1557 = vmatpush2.msra.mxu0 0.0
    %1558 = vmatprep.subr.mxu0 0.0
    %1559 = vmatpush2.msra.mxu0 0.0
    %1560 = vmatprep.subr.mxu0 0.0
    %1561 = vmatpush2.msra.mxu0 0.0
    %1562 = vmatprep.subr.mxu0 0.0
    %1563 = vmatpush2.msra.mxu0 0.0
    %1564 = vmatprep.subr.mxu0 0.0
    %1565 = vmatpush2.msra.mxu0 0.0
    %1566 = vmatprep.subr.mxu0 0.0
    %1567 = vmatpush2.msra.mxu0 0.0
    %1568 = vmatprep.mubr.f32.mxu0 0.0
    %1569 = vmatmul.mubr.f32.gmra.mxu0 %v1401
    %v1570 = vpop.f32.mrf.mxu0
    %v1571 = vadd.f32 %v403, %v1570
    %v1572 = vpop.f32.mrf.mxu0
    %1573 = vdwg.mxu0
    %1575 = vrot.lane.b32.xlu0 %v1397, 32
    %v1576 = vpop.permute.xlu0 %1575
    %v1577 = vsel %vm113, %v1576, 0
    %1579 = vmatprep.subr.mxu0 0.0
    %1580 = vmatpush1.msra.mxu0 0.0
    %1581 = vmatprep.subr.mxu0 0.0
    %1582 = vmatpush1.msra.mxu0 0.0
    %1583 = vmatprep.subr.mxu0 0.0
    %1584 = vmatpush1.msra.mxu0 0.0
    %1585 = vmatprep.subr.mxu0 0.0
    %1586 = vmatpush1.msra.mxu0 0.0
    %1587 = vmatprep.subr.mxu0 0.0
    %1588 = vmatpush1.msra.mxu0 0.0
    %1589 = vmatprep.subr.mxu0 0.0
    %1590 = vmatpush1.msra.mxu0 0.0
    %1591 = vmatprep.subr.mxu0 0.0
    %1592 = vmatpush1.msra.mxu0 0.0
    %1593 = vmatprep.subr.mxu0 0.0
    %1594 = vmatpush1.msra.mxu0 0.0
    %1595 = vmatprep.subr.mxu0 0.0
    %1596 = vmatpush1.msra.mxu0 0.0
    %1597 = vmatprep.subr.mxu0 0.0
    %1598 = vmatpush1.msra.mxu0 0.0
    %1599 = vmatprep.subr.mxu0 0.0
    %1600 = vmatpush1.msra.mxu0 0.0
    %1601 = vmatprep.subr.mxu0 0.0
    %1602 = vmatpush1.msra.mxu0 0.0
    %1603 = vmatprep.subr.mxu0 0.0
    %1604 = vmatpush1.msra.mxu0 %v102
    %1605 = vmatprep.subr.mxu0 0.0
    %1606 = vmatpush1.msra.mxu0 %v101
    %1607 = vmatprep.subr.mxu0 0.0
    %1608 = vmatpush1.msra.mxu0 %v100
    %1609 = vmatprep.subr.mxu0 0.0
    %1610 = vmatpush1.msra.mxu0 %v99
    %1611 = vmatprep.subr.mxu0 0.0
    %1612 = vmatpush2.msra.mxu0 0.0
    %1613 = vmatprep.subr.mxu0 0.0
    %1614 = vmatpush2.msra.mxu0 0.0
    %1615 = vmatprep.subr.mxu0 0.0
    %1616 = vmatpush2.msra.mxu0 0.0
    %1617 = vmatprep.subr.mxu0 0.0
    %1618 = vmatpush2.msra.mxu0 0.0
    %1619 = vmatprep.subr.mxu0 0.0
    %1620 = vmatpush2.msra.mxu0 0.0
    %1621 = vmatprep.subr.mxu0 0.0
    %1622 = vmatpush2.msra.mxu0 0.0
    %1623 = vmatprep.subr.mxu0 0.0
    %1624 = vmatpush2.msra.mxu0 0.0
    %1625 = vmatprep.subr.mxu0 0.0
    %1626 = vmatpush2.msra.mxu0 0.0
    %1627 = vmatprep.subr.mxu0 0.0
    %1628 = vmatpush2.msra.mxu0 0.0
    %1629 = vmatprep.subr.mxu0 0.0
    %1630 = vmatpush2.msra.mxu0 0.0
    %1631 = vmatprep.subr.mxu0 0.0
    %1632 = vmatpush2.msra.mxu0 0.0
    %1633 = vmatprep.subr.mxu0 0.0
    %1634 = vmatpush2.msra.mxu0 0.0
    %1635 = vmatprep.subr.mxu0 0.0
    %1636 = vmatpush2.msra.mxu0 0.0
    %1637 = vmatprep.subr.mxu0 0.0
    %1638 = vmatpush2.msra.mxu0 0.0
    %1639 = vmatprep.subr.mxu0 0.0
    %1640 = vmatpush2.msra.mxu0 0.0
    %1641 = vmatprep.subr.mxu0 0.0
    %1642 = vmatpush2.msra.mxu0 0.0
    %1643 = vmatprep.mubr.f32.mxu0 0.0
    %1644 = vmatmul.mubr.f32.gmra.mxu0 %v1577
    %v1645 = vpop.f32.mrf.mxu0
    %v1646 = vadd.f32 0.0, %v1645
    %v1647 = vpop.f32.mrf.mxu0
    %1648 = vdwg.mxu0
    %v1649 = vadd.f32 %v1571, %v1646
    %v1650 = vxor.u32 %v1649, 2147483648
    %v1651 = vmul.f32 %v1650, 1.442695
    %v1652 = vpow.pop %v1651
    %v1653 = vadd.f32 %v1652, 1.0
    %v1654 = vrcp.pop %v1653
    %v1655 = vmul.f32 1.0, %v1654
    %v1656 = vtanh.pop %v1649
    %v1657 = vmul.f32 %v1655, %v1391
    %1659 = vrot.lane.b32.xlu0 %v1656, 64
    %v1660 = vpop.permute.xlu0 %1659
    %v1662 = vmul.f32 %v1655, %v1660
    %1664 = vrot.lane.b32.xlu0 %v1662, 32
    %v1665 = vpop.permute.xlu0 %1664
    %v1667 = vadd.f32 %v1657, %v1665
    %v1668 = vtanh.pop %v1667
    %1670 = vrot.lane.b32.xlu0 %v1668, 64
    %v1671 = vpop.permute.xlu0 %1670
    %v1673 = vmul.f32 %v1655, %v1671
    %v1675 = vrot.slane %v1503, 2
    %1676 = vrot.lane.b32.xlu0 %v1675, 32
    %v1677 = vpop.permute.xlu0 %1676
    %v1678 = vsel %vm113, %v1677, 0
    %1680 = vmatprep.subr.mxu0 0.0
    %1681 = vmatpush1.msra.mxu0 0.0
    %1682 = vmatprep.subr.mxu0 0.0
    %1683 = vmatpush1.msra.mxu0 0.0
    %1684 = vmatprep.subr.mxu0 0.0
    %1685 = vmatpush1.msra.mxu0 0.0
    %1686 = vmatprep.subr.mxu0 0.0
    %1687 = vmatpush1.msra.mxu0 0.0
    %1688 = vmatprep.subr.mxu0 0.0
    %1689 = vmatpush1.msra.mxu0 0.0
    %1690 = vmatprep.subr.mxu0 0.0
    %1691 = vmatpush1.msra.mxu0 0.0
    %1692 = vmatprep.subr.mxu0 0.0
    %1693 = vmatpush1.msra.mxu0 0.0
    %1694 = vmatprep.subr.mxu0 0.0
    %1695 = vmatpush1.msra.mxu0 0.0
    %1696 = vmatprep.subr.mxu0 0.0
    %1697 = vmatpush1.msra.mxu0 0.0
    %1698 = vmatprep.subr.mxu0 0.0
    %1699 = vmatpush1.msra.mxu0 0.0
    %1700 = vmatprep.subr.mxu0 0.0
    %1701 = vmatpush1.msra.mxu0 0.0
    %1702 = vmatprep.subr.mxu0 0.0
    %1703 = vmatpush1.msra.mxu0 0.0
    %1704 = vmatprep.subr.mxu0 0.0
    %1705 = vmatpush1.msra.mxu0 %v98
    %1706 = vmatprep.subr.mxu0 0.0
    %1707 = vmatpush1.msra.mxu0 %v97
    %1708 = vmatprep.subr.mxu0 0.0
    %1709 = vmatpush1.msra.mxu0 %v96
    %1710 = vmatprep.subr.mxu0 0.0
    %1711 = vmatpush1.msra.mxu0 %v95
    %1712 = vmatprep.subr.mxu0 0.0
    %1713 = vmatpush2.msra.mxu0 0.0
    %1714 = vmatprep.subr.mxu0 0.0
    %1715 = vmatpush2.msra.mxu0 0.0
    %1716 = vmatprep.subr.mxu0 0.0
    %1717 = vmatpush2.msra.mxu0 0.0
    %1718 = vmatprep.subr.mxu0 0.0
    %1719 = vmatpush2.msra.mxu0 0.0
    %1720 = vmatprep.subr.mxu0 0.0
    %1721 = vmatpush2.msra.mxu0 0.0
    %1722 = vmatprep.subr.mxu0 0.0
    %1723 = vmatpush2.msra.mxu0 0.0
    %1724 = vmatprep.subr.mxu0 0.0
    %1725 = vmatpush2.msra.mxu0 0.0
    %1726 = vmatprep.subr.mxu0 0.0
    %1727 = vmatpush2.msra.mxu0 0.0
    %1728 = vmatprep.subr.mxu0 0.0
    %1729 = vmatpush2.msra.mxu0 0.0
    %1730 = vmatprep.subr.mxu0 0.0
    %1731 = vmatpush2.msra.mxu0 0.0
    %1732 = vmatprep.subr.mxu0 0.0
    %1733 = vmatpush2.msra.mxu0 0.0
    %1734 = vmatprep.subr.mxu0 0.0
    %1735 = vmatpush2.msra.mxu0 0.0
    %1736 = vmatprep.subr.mxu0 0.0
    %1737 = vmatpush2.msra.mxu0 0.0
    %1738 = vmatprep.subr.mxu0 0.0
    %1739 = vmatpush2.msra.mxu0 0.0
    %1740 = vmatprep.subr.mxu0 0.0
    %1741 = vmatpush2.msra.mxu0 0.0
    %1742 = vmatprep.subr.mxu0 0.0
    %1743 = vmatpush2.msra.mxu0 0.0
    %1744 = vmatprep.mubr.f32.mxu0 0.0
    %1745 = vmatmul.mubr.f32.gmra.mxu0 %v1678
    %v1746 = vpop.f32.mrf.mxu0
    %v1747 = vadd.f32 0.0, %v1746
    %v1748 = vpop.f32.mrf.mxu0
    %1749 = vdwg.mxu0
    %v1751 = vrot.slane %v1747, 4
    %v1753 = vadd.f32 %v192, %v1751
    %v1754 = vxor.u32 %v1753, 2147483648
    %v1755 = vmul.f32 %v1754, 1.442695
    %v1756 = vpow.pop %v1755
    %v1757 = vadd.f32 %v1756, 1.0
    %v1758 = vrcp.pop %v1757
    %v1759 = vmul.f32 1.0, %v1758
    %v1760 = vtanh.pop %v1753
    %v1762 = vrot.slane %v1497, 6
    %v1764 = vmul.f32 %v1759, %v1762
    %1766 = vrot.lane.b32.xlu0 %v1760, 64
    %v1767 = vpop.permute.xlu0 %1766
    %v1769 = vmul.f32 %v1759, %v1767
    %1771 = vrot.lane.b32.xlu0 %v1769, 32
    %v1772 = vpop.permute.xlu0 %1771
    %v1774 = vadd.f32 %v1764, %v1772
    %v1775 = vtanh.pop %v1774
    %1777 = vrot.lane.b32.xlu0 %v1775, 64
    %v1778 = vpop.permute.xlu0 %1777
    %v1780 = vmul.f32 %v1759, %v1778
    %1781 = vmatprep.subr.mxu0 0.0
    %1782 = vmatpush1.msra.mxu0 0.0
    %1783 = vmatprep.subr.mxu0 0.0
    %1784 = vmatpush1.msra.mxu0 0.0
    %1785 = vmatprep.subr.mxu0 0.0
    %1786 = vmatpush1.msra.mxu0 0.0
    %1787 = vmatprep.subr.mxu0 0.0
    %1788 = vmatpush1.msra.mxu0 0.0
    %1789 = vmatprep.subr.mxu0 0.0
    %1790 = vmatpush1.msra.mxu0 0.0
    %1791 = vmatprep.subr.mxu0 0.0
    %1792 = vmatpush1.msra.mxu0 0.0
    %1793 = vmatprep.subr.mxu0 0.0
    %1794 = vmatpush1.msra.mxu0 0.0
    %1795 = vmatprep.subr.mxu0 0.0
    %1796 = vmatpush1.msra.mxu0 0.0
    %1797 = vmatprep.subr.mxu0 0.0
    %1798 = vmatpush1.msra.mxu0 0.0
    %1799 = vmatprep.subr.mxu0 0.0
    %1800 = vmatpush1.msra.mxu0 0.0
    %1801 = vmatprep.subr.mxu0 0.0
    %1802 = vmatpush1.msra.mxu0 0.0
    %1803 = vmatprep.subr.mxu0 0.0
    %1804 = vmatpush1.msra.mxu0 0.0
    %1805 = vmatprep.subr.mxu0 0.0
    %1806 = vmatpush1.msra.mxu0 %v94
    %1807 = vmatprep.subr.mxu0 0.0
    %1808 = vmatpush1.msra.mxu0 %v93
    %1809 = vmatprep.subr.mxu0 0.0
    %1810 = vmatpush1.msra.mxu0 %v92
    %1811 = vmatprep.subr.mxu0 0.0
    %1812 = vmatpush1.msra.mxu0 %v91
    %1813 = vmatprep.subr.mxu0 0.0
    %1814 = vmatpush2.msra.mxu0 0.0
    %1815 = vmatprep.subr.mxu0 0.0
    %1816 = vmatpush2.msra.mxu0 0.0
    %1817 = vmatprep.subr.mxu0 0.0
    %1818 = vmatpush2.msra.mxu0 0.0
    %1819 = vmatprep.subr.mxu0 0.0
    %1820 = vmatpush2.msra.mxu0 0.0
    %1821 = vmatprep.subr.mxu0 0.0
    %1822 = vmatpush2.msra.mxu0 0.0
    %1823 = vmatprep.subr.mxu0 0.0
    %1824 = vmatpush2.msra.mxu0 0.0
    %1825 = vmatprep.subr.mxu0 0.0
    %1826 = vmatpush2.msra.mxu0 0.0
    %1827 = vmatprep.subr.mxu0 0.0
    %1828 = vmatpush2.msra.mxu0 0.0
    %1829 = vmatprep.subr.mxu0 0.0
    %1830 = vmatpush2.msra.mxu0 0.0
    %1831 = vmatprep.subr.mxu0 0.0
    %1832 = vmatpush2.msra.mxu0 0.0
    %1833 = vmatprep.subr.mxu0 0.0
    %1834 = vmatpush2.msra.mxu0 0.0
    %1835 = vmatprep.subr.mxu0 0.0
    %1836 = vmatpush2.msra.mxu0 0.0
    %1837 = vmatprep.subr.mxu0 0.0
    %1838 = vmatpush2.msra.mxu0 0.0
    %1839 = vmatprep.subr.mxu0 0.0
    %1840 = vmatpush2.msra.mxu0 0.0
    %1841 = vmatprep.subr.mxu0 0.0
    %1842 = vmatpush2.msra.mxu0 0.0
    %1843 = vmatprep.subr.mxu0 0.0
    %1844 = vmatpush2.msra.mxu0 0.0
    %1845 = vmatprep.mubr.f32.mxu0 0.0
    %1846 = vmatmul.mubr.f32.gmra.mxu0 %v1678
    %v1847 = vpop.f32.mrf.mxu0
    %v1848 = vadd.f32 %v403, %v1847
    %v1849 = vpop.f32.mrf.mxu0
    %1850 = vdwg.mxu0
    %1852 = vrot.lane.b32.xlu0 %v1673, 32
    %v1853 = vpop.permute.xlu0 %1852
    %v1854 = vsel %vm113, %v1853, 0
    %1856 = vmatprep.subr.mxu0 0.0
    %1857 = vmatpush1.msra.mxu0 0.0
    %1858 = vmatprep.subr.mxu0 0.0
    %1859 = vmatpush1.msra.mxu0 0.0
    %1860 = vmatprep.subr.mxu0 0.0
    %1861 = vmatpush1.msra.mxu0 0.0
    %1862 = vmatprep.subr.mxu0 0.0
    %1863 = vmatpush1.msra.mxu0 0.0
    %1864 = vmatprep.subr.mxu0 0.0
    %1865 = vmatpush1.msra.mxu0 0.0
    %1866 = vmatprep.subr.mxu0 0.0
    %1867 = vmatpush1.msra.mxu0 0.0
    %1868 = vmatprep.subr.mxu0 0.0
    %1869 = vmatpush1.msra.mxu0 0.0
    %1870 = vmatprep.subr.mxu0 0.0
    %1871 = vmatpush1.msra.mxu0 0.0
    %1872 = vmatprep.subr.mxu0 0.0
    %1873 = vmatpush1.msra.mxu0 0.0
    %1874 = vmatprep.subr.mxu0 0.0
    %1875 = vmatpush1.msra.mxu0 0.0
    %1876 = vmatprep.subr.mxu0 0.0
    %1877 = vmatpush1.msra.mxu0 0.0
    %1878 = vmatprep.subr.mxu0 0.0
    %1879 = vmatpush1.msra.mxu0 0.0
    %1880 = vmatprep.subr.mxu0 0.0
    %1881 = vmatpush1.msra.mxu0 %v102
    %1882 = vmatprep.subr.mxu0 0.0
    %1883 = vmatpush1.msra.mxu0 %v101
    %1884 = vmatprep.subr.mxu0 0.0
    %1885 = vmatpush1.msra.mxu0 %v100
    %1886 = vmatprep.subr.mxu0 0.0
    %1887 = vmatpush1.msra.mxu0 %v99
    %1888 = vmatprep.subr.mxu0 0.0
    %1889 = vmatpush2.msra.mxu0 0.0
    %1890 = vmatprep.subr.mxu0 0.0
    %1891 = vmatpush2.msra.mxu0 0.0
    %1892 = vmatprep.subr.mxu0 0.0
    %1893 = vmatpush2.msra.mxu0 0.0
    %1894 = vmatprep.subr.mxu0 0.0
    %1895 = vmatpush2.msra.mxu0 0.0
    %1896 = vmatprep.subr.mxu0 0.0
    %1897 = vmatpush2.msra.mxu0 0.0
    %1898 = vmatprep.subr.mxu0 0.0
    %1899 = vmatpush2.msra.mxu0 0.0
    %1900 = vmatprep.subr.mxu0 0.0
    %1901 = vmatpush2.msra.mxu0 0.0
    %1902 = vmatprep.subr.mxu0 0.0
    %1903 = vmatpush2.msra.mxu0 0.0
    %1904 = vmatprep.subr.mxu0 0.0
    %1905 = vmatpush2.msra.mxu0 0.0
    %1906 = vmatprep.subr.mxu0 0.0
    %1907 = vmatpush2.msra.mxu0 0.0
    %1908 = vmatprep.subr.mxu0 0.0
    %1909 = vmatpush2.msra.mxu0 0.0
    %1910 = vmatprep.subr.mxu0 0.0
    %1911 = vmatpush2.msra.mxu0 0.0
    %1912 = vmatprep.subr.mxu0 0.0
    %1913 = vmatpush2.msra.mxu0 0.0
    %1914 = vmatprep.subr.mxu0 0.0
    %1915 = vmatpush2.msra.mxu0 0.0
    %1916 = vmatprep.subr.mxu0 0.0
    %1917 = vmatpush2.msra.mxu0 0.0
    %1918 = vmatprep.subr.mxu0 0.0
    %1919 = vmatpush2.msra.mxu0 0.0
    %1920 = vmatprep.mubr.f32.mxu0 0.0
    %1921 = vmatmul.mubr.f32.gmra.mxu0 %v1854
    %v1922 = vpop.f32.mrf.mxu0
    %v1923 = vadd.f32 0.0, %v1922
    %v1924 = vpop.f32.mrf.mxu0
    %1925 = vdwg.mxu0
    %v1926 = vadd.f32 %v1848, %v1923
    %v1927 = vxor.u32 %v1926, 2147483648
    %v1928 = vmul.f32 %v1927, 1.442695
    %v1929 = vpow.pop %v1928
    %v1930 = vadd.f32 %v1929, 1.0
    %v1931 = vrcp.pop %v1930
    %v1932 = vmul.f32 1.0, %v1931
    %v1933 = vtanh.pop %v1926
    %v1934 = vmul.f32 %v1932, %v1667
    %1936 = vrot.lane.b32.xlu0 %v1933, 64
    %v1937 = vpop.permute.xlu0 %1936
    %v1939 = vmul.f32 %v1932, %v1937
    %1941 = vrot.lane.b32.xlu0 %v1939, 32
    %v1942 = vpop.permute.xlu0 %1941
    %v1944 = vadd.f32 %v1934, %v1942
    %v1945 = vtanh.pop %v1944
    %1947 = vrot.lane.b32.xlu0 %v1945, 64
    %v1948 = vpop.permute.xlu0 %1947
    %v1950 = vmul.f32 %v1932, %v1948
    %v1952 = vrot.slane %v1780, 4
    %1953 = vrot.lane.b32.xlu0 %v1952, 32
    %v1954 = vpop.permute.xlu0 %1953
    %v1955 = vsel %vm113, %v1954, 0
    %1957 = vmatprep.subr.mxu0 0.0
    %1958 = vmatpush1.msra.mxu0 0.0
    %1959 = vmatprep.subr.mxu0 0.0
    %1960 = vmatpush1.msra.mxu0 0.0
    %1961 = vmatprep.subr.mxu0 0.0
    %1962 = vmatpush1.msra.mxu0 0.0
    %1963 = vmatprep.subr.mxu0 0.0
    %1964 = vmatpush1.msra.mxu0 0.0
    %1965 = vmatprep.subr.mxu0 0.0
    %1966 = vmatpush1.msra.mxu0 0.0
    %1967 = vmatprep.subr.mxu0 0.0
    %1968 = vmatpush1.msra.mxu0 0.0
    %1969 = vmatprep.subr.mxu0 0.0
    %1970 = vmatpush1.msra.mxu0 0.0
    %1971 = vmatprep.subr.mxu0 0.0
    %1972 = vmatpush1.msra.mxu0 0.0
    %1973 = vmatprep.subr.mxu0 0.0
    %1974 = vmatpush1.msra.mxu0 0.0
    %1975 = vmatprep.subr.mxu0 0.0
    %1976 = vmatpush1.msra.mxu0 0.0
    %1977 = vmatprep.subr.mxu0 0.0
    %1978 = vmatpush1.msra.mxu0 0.0
    %1979 = vmatprep.subr.mxu0 0.0
    %1980 = vmatpush1.msra.mxu0 0.0
    %1981 = vmatprep.subr.mxu0 0.0
    %1982 = vmatpush1.msra.mxu0 %v98
    %1983 = vmatprep.subr.mxu0 0.0
    %1984 = vmatpush1.msra.mxu0 %v97
    %1985 = vmatprep.subr.mxu0 0.0
    %1986 = vmatpush1.msra.mxu0 %v96
    %1987 = vmatprep.subr.mxu0 0.0
    %1988 = vmatpush1.msra.mxu0 %v95
    %1989 = vmatprep.subr.mxu0 0.0
    %1990 = vmatpush2.msra.mxu0 0.0
    %1991 = vmatprep.subr.mxu0 0.0
    %1992 = vmatpush2.msra.mxu0 0.0
    %1993 = vmatprep.subr.mxu0 0.0
    %1994 = vmatpush2.msra.mxu0 0.0
    %1995 = vmatprep.subr.mxu0 0.0
    %1996 = vmatpush2.msra.mxu0 0.0
    %1997 = vmatprep.subr.mxu0 0.0
    %1998 = vmatpush2.msra.mxu0 0.0
    %1999 = vmatprep.subr.mxu0 0.0
    %2000 = vmatpush2.msra.mxu0 0.0
    %2001 = vmatprep.subr.mxu0 0.0
    %2002 = vmatpush2.msra.mxu0 0.0
    %2003 = vmatprep.subr.mxu0 0.0
    %2004 = vmatpush2.msra.mxu0 0.0
    %2005 = vmatprep.subr.mxu0 0.0
    %2006 = vmatpush2.msra.mxu0 0.0
    %2007 = vmatprep.subr.mxu0 0.0
    %2008 = vmatpush2.msra.mxu0 0.0
    %2009 = vmatprep.subr.mxu0 0.0
    %2010 = vmatpush2.msra.mxu0 0.0
    %2011 = vmatprep.subr.mxu0 0.0
    %2012 = vmatpush2.msra.mxu0 0.0
    %2013 = vmatprep.subr.mxu0 0.0
    %2014 = vmatpush2.msra.mxu0 0.0
    %2015 = vmatprep.subr.mxu0 0.0
    %2016 = vmatpush2.msra.mxu0 0.0
    %2017 = vmatprep.subr.mxu0 0.0
    %2018 = vmatpush2.msra.mxu0 0.0
    %2019 = vmatprep.subr.mxu0 0.0
    %2020 = vmatpush2.msra.mxu0 0.0
    %2021 = vmatprep.mubr.f32.mxu0 0.0
    %2022 = vmatmul.mubr.f32.gmra.mxu0 %v1955
    %v2023 = vpop.f32.mrf.mxu0
    %v2024 = vadd.f32 0.0, %v2023
    %v2025 = vpop.f32.mrf.mxu0
    %2026 = vdwg.mxu0
    %v2028 = vrot.slane %v2024, 2
    %v2030 = vadd.f32 %v192, %v2028
    %v2031 = vxor.u32 %v2030, 2147483648
    %v2032 = vmul.f32 %v2031, 1.442695
    %v2033 = vpow.pop %v2032
    %v2034 = vadd.f32 %v2033, 1.0
    %v2035 = vrcp.pop %v2034
    %v2036 = vmul.f32 1.0, %v2035
    %v2037 = vtanh.pop %v2030
    %v2039 = vrot.slane %v1774, 6
    %v2041 = vmul.f32 %v2036, %v2039
    %2043 = vrot.lane.b32.xlu0 %v2037, 64
    %v2044 = vpop.permute.xlu0 %2043
    %v2046 = vmul.f32 %v2036, %v2044
    %2048 = vrot.lane.b32.xlu0 %v2046, 32
    %v2049 = vpop.permute.xlu0 %2048
    %v2051 = vadd.f32 %v2041, %v2049
    %v2052 = vtanh.pop %v2051
    %2054 = vrot.lane.b32.xlu0 %v2052, 64
    %v2055 = vpop.permute.xlu0 %2054
    %v2057 = vmul.f32 %v2036, %v2055
    %2058 = vmatprep.subr.mxu0 0.0
    %2059 = vmatpush1.msra.mxu0 0.0
    %2060 = vmatprep.subr.mxu0 0.0
    %2061 = vmatpush1.msra.mxu0 0.0
    %2062 = vmatprep.subr.mxu0 0.0
    %2063 = vmatpush1.msra.mxu0 0.0
    %2064 = vmatprep.subr.mxu0 0.0
    %2065 = vmatpush1.msra.mxu0 0.0
    %2066 = vmatprep.subr.mxu0 0.0
    %2067 = vmatpush1.msra.mxu0 0.0
    %2068 = vmatprep.subr.mxu0 0.0
    %2069 = vmatpush1.msra.mxu0 0.0
    %2070 = vmatprep.subr.mxu0 0.0
    %2071 = vmatpush1.msra.mxu0 0.0
    %2072 = vmatprep.subr.mxu0 0.0
    %2073 = vmatpush1.msra.mxu0 0.0
    %2074 = vmatprep.subr.mxu0 0.0
    %2075 = vmatpush1.msra.mxu0 0.0
    %2076 = vmatprep.subr.mxu0 0.0
    %2077 = vmatpush1.msra.mxu0 0.0
    %2078 = vmatprep.subr.mxu0 0.0
    %2079 = vmatpush1.msra.mxu0 0.0
    %2080 = vmatprep.subr.mxu0 0.0
    %2081 = vmatpush1.msra.mxu0 0.0
    %2082 = vmatprep.subr.mxu0 0.0
    %2083 = vmatpush1.msra.mxu0 %v94
    %2084 = vmatprep.subr.mxu0 0.0
    %2085 = vmatpush1.msra.mxu0 %v93
    %2086 = vmatprep.subr.mxu0 0.0
    %2087 = vmatpush1.msra.mxu0 %v92
    %2088 = vmatprep.subr.mxu0 0.0
    %2089 = vmatpush1.msra.mxu0 %v91
    %2090 = vmatprep.subr.mxu0 0.0
    %2091 = vmatpush2.msra.mxu0 0.0
    %2092 = vmatprep.subr.mxu0 0.0
    %2093 = vmatpush2.msra.mxu0 0.0
    %2094 = vmatprep.subr.mxu0 0.0
    %2095 = vmatpush2.msra.mxu0 0.0
    %2096 = vmatprep.subr.mxu0 0.0
    %2097 = vmatpush2.msra.mxu0 0.0
    %2098 = vmatprep.subr.mxu0 0.0
    %2099 = vmatpush2.msra.mxu0 0.0
    %2100 = vmatprep.subr.mxu0 0.0
    %2101 = vmatpush2.msra.mxu0 0.0
    %2102 = vmatprep.subr.mxu0 0.0
    %2103 = vmatpush2.msra.mxu0 0.0
    %2104 = vmatprep.subr.mxu0 0.0
    %2105 = vmatpush2.msra.mxu0 0.0
    %2106 = vmatprep.subr.mxu0 0.0
    %2107 = vmatpush2.msra.mxu0 0.0
    %2108 = vmatprep.subr.mxu0 0.0
    %2109 = vmatpush2.msra.mxu0 0.0
    %2110 = vmatprep.subr.mxu0 0.0
    %2111 = vmatpush2.msra.mxu0 0.0
    %2112 = vmatprep.subr.mxu0 0.0
    %2113 = vmatpush2.msra.mxu0 0.0
    %2114 = vmatprep.subr.mxu0 0.0
    %2115 = vmatpush2.msra.mxu0 0.0
    %2116 = vmatprep.subr.mxu0 0.0
    %2117 = vmatpush2.msra.mxu0 0.0
    %2118 = vmatprep.subr.mxu0 0.0
    %2119 = vmatpush2.msra.mxu0 0.0
    %2120 = vmatprep.subr.mxu0 0.0
    %2121 = vmatpush2.msra.mxu0 0.0
    %2122 = vmatprep.mubr.f32.mxu0 0.0
    %2123 = vmatmul.mubr.f32.gmra.mxu0 %v1955
    %v2124 = vpop.f32.mrf.mxu0
    %v2125 = vadd.f32 %v403, %v2124
    %v2126 = vpop.f32.mrf.mxu0
    %2127 = vdwg.mxu0
    %2129 = vrot.lane.b32.xlu0 %v1950, 32
    %v2130 = vpop.permute.xlu0 %2129
    %v2131 = vsel %vm113, %v2130, 0
    %2133 = vmatprep.subr.mxu0 0.0
    %2134 = vmatpush1.msra.mxu0 0.0
    %2135 = vmatprep.subr.mxu0 0.0
    %2136 = vmatpush1.msra.mxu0 0.0
    %2137 = vmatprep.subr.mxu0 0.0
    %2138 = vmatpush1.msra.mxu0 0.0
    %2139 = vmatprep.subr.mxu0 0.0
    %2140 = vmatpush1.msra.mxu0 0.0
    %2141 = vmatprep.subr.mxu0 0.0
    %2142 = vmatpush1.msra.mxu0 0.0
    %2143 = vmatprep.subr.mxu0 0.0
    %2144 = vmatpush1.msra.mxu0 0.0
    %2145 = vmatprep.subr.mxu0 0.0
    %2146 = vmatpush1.msra.mxu0 0.0
    %2147 = vmatprep.subr.mxu0 0.0
    %2148 = vmatpush1.msra.mxu0 0.0
    %2149 = vmatprep.subr.mxu0 0.0
    %2150 = vmatpush1.msra.mxu0 0.0
    %2151 = vmatprep.subr.mxu0 0.0
    %2152 = vmatpush1.msra.mxu0 0.0
    %2153 = vmatprep.subr.mxu0 0.0
    %2154 = vmatpush1.msra.mxu0 0.0
    %2155 = vmatprep.subr.mxu0 0.0
    %2156 = vmatpush1.msra.mxu0 0.0
    %2157 = vmatprep.subr.mxu0 0.0
    %2158 = vmatpush1.msra.mxu0 %v102
    %2159 = vmatprep.subr.mxu0 0.0
    %2160 = vmatpush1.msra.mxu0 %v101
    %2161 = vmatprep.subr.mxu0 0.0
    %2162 = vmatpush1.msra.mxu0 %v100
    %2163 = vmatprep.subr.mxu0 0.0
    %2164 = vmatpush1.msra.mxu0 %v99
    %2165 = vmatprep.subr.mxu0 0.0
    %2166 = vmatpush2.msra.mxu0 0.0
    %2167 = vmatprep.subr.mxu0 0.0
    %2168 = vmatpush2.msra.mxu0 0.0
    %2169 = vmatprep.subr.mxu0 0.0
    %2170 = vmatpush2.msra.mxu0 0.0
    %2171 = vmatprep.subr.mxu0 0.0
    %2172 = vmatpush2.msra.mxu0 0.0
    %2173 = vmatprep.subr.mxu0 0.0
    %2174 = vmatpush2.msra.mxu0 0.0
    %2175 = vmatprep.subr.mxu0 0.0
    %2176 = vmatpush2.msra.mxu0 0.0
    %2177 = vmatprep.subr.mxu0 0.0
    %2178 = vmatpush2.msra.mxu0 0.0
    %2179 = vmatprep.subr.mxu0 0.0
    %2180 = vmatpush2.msra.mxu0 0.0
    %2181 = vmatprep.subr.mxu0 0.0
    %2182 = vmatpush2.msra.mxu0 0.0
    %2183 = vmatprep.subr.mxu0 0.0
    %2184 = vmatpush2.msra.mxu0 0.0
    %2185 = vmatprep.subr.mxu0 0.0
    %2186 = vmatpush2.msra.mxu0 0.0
    %2187 = vmatprep.subr.mxu0 0.0
    %2188 = vmatpush2.msra.mxu0 0.0
    %2189 = vmatprep.subr.mxu0 0.0
    %2190 = vmatpush2.msra.mxu0 0.0
    %2191 = vmatprep.subr.mxu0 0.0
    %2192 = vmatpush2.msra.mxu0 0.0
    %2193 = vmatprep.subr.mxu0 0.0
    %2194 = vmatpush2.msra.mxu0 0.0
    %2195 = vmatprep.subr.mxu0 0.0
    %2196 = vmatpush2.msra.mxu0 0.0
    %2197 = vmatprep.mubr.f32.mxu0 0.0
    %2198 = vmatmul.mubr.f32.gmra.mxu0 %v2131
    %v2199 = vpop.f32.mrf.mxu0
    %v2200 = vadd.f32 0.0, %v2199
    %v2201 = vpop.f32.mrf.mxu0
    %2202 = vdwg.mxu0
    %v2203 = vadd.f32 %v2125, %v2200
    %v2204 = vxor.u32 %v2203, 2147483648
    %v2205 = vmul.f32 %v2204, 1.442695
    %v2206 = vpow.pop %v2205
    %v2207 = vadd.f32 %v2206, 1.0
    %v2208 = vrcp.pop %v2207
    %v2209 = vmul.f32 1.0, %v2208
    %v2210 = vtanh.pop %v2203
    %v2211 = vmul.f32 %v2209, %v1944
    %2213 = vrot.lane.b32.xlu0 %v2210, 64
    %v2214 = vpop.permute.xlu0 %2213
    %v2216 = vmul.f32 %v2209, %v2214
    %2218 = vrot.lane.b32.xlu0 %v2216, 32
    %v2219 = vpop.permute.xlu0 %2218
    %v2221 = vadd.f32 %v2211, %v2219
    %v2222 = vtanh.pop %v2221
    %2224 = vrot.lane.b32.xlu0 %v2222, 64
    %v2225 = vpop.permute.xlu0 %2224
    %v2227 = vmul.f32 %v2209, %v2225
    %v2229 = vrot.slane %v2057, 6
    %2230 = vrot.lane.b32.xlu0 %v2229, 32
    %v2231 = vpop.permute.xlu0 %2230
    %v2232 = vsel %vm113, %v2231, 0
    %2234 = vmatprep.subr.mxu0 0.0
    %2235 = vmatpush1.msra.mxu0 0.0
    %2236 = vmatprep.subr.mxu0 0.0
    %2237 = vmatpush1.msra.mxu0 0.0
    %2238 = vmatprep.subr.mxu0 0.0
    %2239 = vmatpush1.msra.mxu0 0.0
    %2240 = vmatprep.subr.mxu0 0.0
    %2241 = vmatpush1.msra.mxu0 0.0
    %2242 = vmatprep.subr.mxu0 0.0
    %2243 = vmatpush1.msra.mxu0 0.0
    %2244 = vmatprep.subr.mxu0 0.0
    %2245 = vmatpush1.msra.mxu0 0.0
    %2246 = vmatprep.subr.mxu0 0.0
    %2247 = vmatpush1.msra.mxu0 0.0
    %2248 = vmatprep.subr.mxu0 0.0
    %2249 = vmatpush1.msra.mxu0 0.0
    %2250 = vmatprep.subr.mxu0 0.0
    %2251 = vmatpush1.msra.mxu0 0.0
    %2252 = vmatprep.subr.mxu0 0.0
    %2253 = vmatpush1.msra.mxu0 0.0
    %2254 = vmatprep.subr.mxu0 0.0
    %2255 = vmatpush1.msra.mxu0 0.0
    %2256 = vmatprep.subr.mxu0 0.0
    %2257 = vmatpush1.msra.mxu0 0.0
    %2258 = vmatprep.subr.mxu0 0.0
    %2259 = vmatpush1.msra.mxu0 %v94
    %2260 = vmatprep.subr.mxu0 0.0
    %2261 = vmatpush1.msra.mxu0 %v93
    %2262 = vmatprep.subr.mxu0 0.0
    %2263 = vmatpush1.msra.mxu0 %v92
    %2264 = vmatprep.subr.mxu0 0.0
    %2265 = vmatpush1.msra.mxu0 %v91
    %2266 = vmatprep.subr.mxu0 0.0
    %2267 = vmatpush2.msra.mxu0 0.0
    %2268 = vmatprep.subr.mxu0 0.0
    %2269 = vmatpush2.msra.mxu0 0.0
    %2270 = vmatprep.subr.mxu0 0.0
    %2271 = vmatpush2.msra.mxu0 0.0
    %2272 = vmatprep.subr.mxu0 0.0
    %2273 = vmatpush2.msra.mxu0 0.0
    %2274 = vmatprep.subr.mxu0 0.0
    %2275 = vmatpush2.msra.mxu0 0.0
    %2276 = vmatprep.subr.mxu0 0.0
    %2277 = vmatpush2.msra.mxu0 0.0
    %2278 = vmatprep.subr.mxu0 0.0
    %2279 = vmatpush2.msra.mxu0 0.0
    %2280 = vmatprep.subr.mxu0 0.0
    %2281 = vmatpush2.msra.mxu0 0.0
    %2282 = vmatprep.subr.mxu0 0.0
    %2283 = vmatpush2.msra.mxu0 0.0
    %2284 = vmatprep.subr.mxu0 0.0
    %2285 = vmatpush2.msra.mxu0 0.0
    %2286 = vmatprep.subr.mxu0 0.0
    %2287 = vmatpush2.msra.mxu0 0.0
    %2288 = vmatprep.subr.mxu0 0.0
    %2289 = vmatpush2.msra.mxu0 0.0
    %2290 = vmatprep.subr.mxu0 0.0
    %2291 = vmatpush2.msra.mxu0 0.0
    %2292 = vmatprep.subr.mxu0 0.0
    %2293 = vmatpush2.msra.mxu0 0.0
    %2294 = vmatprep.subr.mxu0 0.0
    %2295 = vmatpush2.msra.mxu0 0.0
    %2296 = vmatprep.subr.mxu0 0.0
    %2297 = vmatpush2.msra.mxu0 0.0
    %2298 = vmatprep.mubr.f32.mxu0 0.0
    %2299 = vmatmul.mubr.f32.gmra.mxu0 %v2232
    %v2300 = vpop.f32.mrf.mxu0
    %v2301 = vadd.f32 %v403, %v2300
    %v2302 = vpop.f32.mrf.mxu0
    %2303 = vdwg.mxu0
    %2305 = vrot.lane.b32.xlu0 %v2227, 32
    %v2306 = vpop.permute.xlu0 %2305
    %v2307 = vsel %vm113, %v2306, 0
    %2309 = vmatprep.subr.mxu0 0.0
    %2310 = vmatpush1.msra.mxu0 0.0
    %2311 = vmatprep.subr.mxu0 0.0
    %2312 = vmatpush1.msra.mxu0 0.0
    %2313 = vmatprep.subr.mxu0 0.0
    %2314 = vmatpush1.msra.mxu0 0.0
    %2315 = vmatprep.subr.mxu0 0.0
    %2316 = vmatpush1.msra.mxu0 0.0
    %2317 = vmatprep.subr.mxu0 0.0
    %2318 = vmatpush1.msra.mxu0 0.0
    %2319 = vmatprep.subr.mxu0 0.0
    %2320 = vmatpush1.msra.mxu0 0.0
    %2321 = vmatprep.subr.mxu0 0.0
    %2322 = vmatpush1.msra.mxu0 0.0
    %2323 = vmatprep.subr.mxu0 0.0
    %2324 = vmatpush1.msra.mxu0 0.0
    %2325 = vmatprep.subr.mxu0 0.0
    %2326 = vmatpush1.msra.mxu0 0.0
    %2327 = vmatprep.subr.mxu0 0.0
    %2328 = vmatpush1.msra.mxu0 0.0
    %2329 = vmatprep.subr.mxu0 0.0
    %2330 = vmatpush1.msra.mxu0 0.0
    %2331 = vmatprep.subr.mxu0 0.0
    %2332 = vmatpush1.msra.mxu0 0.0
    %2333 = vmatprep.subr.mxu0 0.0
    %2334 = vmatpush1.msra.mxu0 %v102
    %2335 = vmatprep.subr.mxu0 0.0
    %2336 = vmatpush1.msra.mxu0 %v101
    %2337 = vmatprep.subr.mxu0 0.0
    %2338 = vmatpush1.msra.mxu0 %v100
    %2339 = vmatprep.subr.mxu0 0.0
    %2340 = vmatpush1.msra.mxu0 %v99
    %2341 = vmatprep.subr.mxu0 0.0
    %2342 = vmatpush2.msra.mxu0 0.0
    %2343 = vmatprep.subr.mxu0 0.0
    %2344 = vmatpush2.msra.mxu0 0.0
    %2345 = vmatprep.subr.mxu0 0.0
    %2346 = vmatpush2.msra.mxu0 0.0
    %2347 = vmatprep.subr.mxu0 0.0
    %2348 = vmatpush2.msra.mxu0 0.0
    %2349 = vmatprep.subr.mxu0 0.0
    %2350 = vmatpush2.msra.mxu0 0.0
    %2351 = vmatprep.subr.mxu0 0.0
    %2352 = vmatpush2.msra.mxu0 0.0
    %2353 = vmatprep.subr.mxu0 0.0
    %2354 = vmatpush2.msra.mxu0 0.0
    %2355 = vmatprep.subr.mxu0 0.0
    %2356 = vmatpush2.msra.mxu0 0.0
    %2357 = vmatprep.subr.mxu0 0.0
    %2358 = vmatpush2.msra.mxu0 0.0
    %2359 = vmatprep.subr.mxu0 0.0
    %2360 = vmatpush2.msra.mxu0 0.0
    %2361 = vmatprep.subr.mxu0 0.0
    %2362 = vmatpush2.msra.mxu0 0.0
    %2363 = vmatprep.subr.mxu0 0.0
    %2364 = vmatpush2.msra.mxu0 0.0
    %2365 = vmatprep.subr.mxu0 0.0
    %2366 = vmatpush2.msra.mxu0 0.0
    %2367 = vmatprep.subr.mxu0 0.0
    %2368 = vmatpush2.msra.mxu0 0.0
    %2369 = vmatprep.subr.mxu0 0.0
    %2370 = vmatpush2.msra.mxu0 0.0
    %2371 = vmatprep.subr.mxu0 0.0
    %2372 = vmatpush2.msra.mxu0 0.0
    %2373 = vmatprep.mubr.f32.mxu0 0.0
    %2374 = vmatmul.mubr.f32.gmra.mxu0 %v2307
    %v2375 = vpop.f32.mrf.mxu0
    %v2376 = vadd.f32 0.0, %v2375
    %v2377 = vpop.f32.mrf.mxu0
    %2378 = vdwg.mxu0
    %v2379 = vadd.f32 %v2301, %v2376
    %v2380 = vxor.u32 %v2379, 2147483648
    %v2381 = vmul.f32 %v2380, 1.442695
    %v2382 = vpow.pop %v2381
    %v2383 = vadd.f32 %v2382, 1.0
    %v2384 = vrcp.pop %v2383
    %v2385 = vmul.f32 1.0, %v2384
    %v2386 = vtanh.pop %v2379
    %v2387 = vmul.f32 %v2385, %v2221
    %2389 = vrot.lane.b32.xlu0 %v2386, 64
    %v2390 = vpop.permute.xlu0 %2389
    %v2392 = vmul.f32 %v2385, %v2390
    %2394 = vrot.lane.b32.xlu0 %v2392, 32
    %v2395 = vpop.permute.xlu0 %2394
    %v2397 = vadd.f32 %v2387, %v2395
    %v2398 = vtanh.pop %v2397
    %2400 = vrot.lane.b32.xlu0 %v2398, 64
    %v2401 = vpop.permute.xlu0 %2400
    %v2403 = vmul.f32 %v2385, %v2401
    %vm2404 = vcmask 1042176
    %v2405 = vsel %vm2404, %v569, 0.0
    %v2406 = vrot.slane %v2405, 4
    %v2407 = vadd.f32 %v2405, %v2406
    %v2408 = vrot.slane %v2407, 2
    %v2409 = vadd.f32 %v2407, %v2408
    %v2410 = vrot.slane %v2409, 1
    %v2411 = vadd.f32 %v2409, %v2410
    %v2412 = vrcp.pop 2.0
    %v2413 = vmul.f32 %v2411, %v2412
    %v2414 = vsel %vm2404, %v846, 0.0
    %v2415 = vrot.slane %v2414, 4
    %v2416 = vadd.f32 %v2414, %v2415
    %v2417 = vrot.slane %v2416, 2
    %v2418 = vadd.f32 %v2416, %v2417
    %v2419 = vrot.slane %v2418, 1
    %v2420 = vadd.f32 %v2418, %v2419
    %v2421 = vmul.f32 %v2420, %v2412
    %v2422 = vsel %vm2404, %v1123, 0.0
    %v2423 = vrot.slane %v2422, 4
    %v2424 = vadd.f32 %v2422, %v2423
    %v2425 = vrot.slane %v2424, 2
    %v2426 = vadd.f32 %v2424, %v2425
    %v2427 = vrot.slane %v2426, 1
    %v2428 = vadd.f32 %v2426, %v2427
    %v2429 = vmul.f32 %v2428, %v2412
    %v2430 = vsel %vm2404, %v1397, 0.0
    %v2431 = vrot.slane %v2430, 4
    %v2432 = vadd.f32 %v2430, %v2431
    %v2433 = vrot.slane %v2432, 2
    %v2434 = vadd.f32 %v2432, %v2433
    %v2435 = vrot.slane %v2434, 1
    %v2436 = vadd.f32 %v2434, %v2435
    %v2437 = vmul.f32 %v2436, %v2412
    %v2438 = vsel %vm2404, %v1673, 0.0
    %v2439 = vrot.slane %v2438, 4
    %v2440 = vadd.f32 %v2438, %v2439
    %v2441 = vrot.slane %v2440, 2
    %v2442 = vadd.f32 %v2440, %v2441
    %v2443 = vrot.slane %v2442, 1
    %v2444 = vadd.f32 %v2442, %v2443
    %v2445 = vmul.f32 %v2444, %v2412
    %v2446 = vsel %vm2404, %v1950, 0.0
    %v2447 = vrot.slane %v2446, 4
    %v2448 = vadd.f32 %v2446, %v2447
    %v2449 = vrot.slane %v2448, 2
    %v2450 = vadd.f32 %v2448, %v2449
    %v2451 = vrot.slane %v2450, 1
    %v2452 = vadd.f32 %v2450, %v2451
    %v2453 = vmul.f32 %v2452, %v2412
    %v2454 = vsel %vm2404, %v2227, 0.0
    %v2455 = vrot.slane %v2454, 4
    %v2456 = vadd.f32 %v2454, %v2455
    %v2457 = vrot.slane %v2456, 2
    %v2458 = vadd.f32 %v2456, %v2457
    %v2459 = vrot.slane %v2458, 1
    %v2460 = vadd.f32 %v2458, %v2459
    %v2461 = vmul.f32 %v2460, %v2412
    %v2462 = vsel %vm2404, %v2403, 0.0
    %v2463 = vrot.slane %v2462, 4
    %v2464 = vadd.f32 %v2462, %v2463
    %v2465 = vrot.slane %v2464, 2
    %v2466 = vadd.f32 %v2464, %v2465
    %v2467 = vrot.slane %v2466, 1
    %v2468 = vadd.f32 %v2466, %v2467
    %v2469 = vmul.f32 %v2468, %v2412
    %vm2470 = vcmask 1040384
    %v2471 = vsel %vm2470, %v2413, %v2421
    %vm2472 = vcmask 1041408
    %v2473 = vsel %vm2472, %v2471, %v2429
    %vm2474 = vcmask 1042432
    %v2475 = vsel %vm2474, %v2473, %v2437
    %vm2476 = vcmask 1043456
    %v2477 = vsel %vm2476, %v2475, %v2445
    %vm2478 = vcmask 1044480
    %v2479 = vsel %vm2478, %v2477, %v2453
    %vm2480 = vcmask 1045504
    %v2481 = vsel %vm2480, %v2479, %v2461
    %vm2482 = vcmask 1046528
    %v2483 = vsel %vm2482, %v2481, %v2469
    %v2484 = vld [vmem:[%s7] sm:$0xff]
    %v2485 = vld [vmem:[%s7 + $0x8] sm:$0xff]
    %v2486 = vld [vmem:[%s7 + $0x10] sm:$0xff]
    %v2487 = vld [vmem:[%s7 + $0x18] sm:$0xff]
    %v2488 = vld [vmem:[%s8] sm:$0x1]
    %v2490 = vlaneseq
    %v2491 = vshrl.u32 %v2490, 7
    %v2492 = vsub.s32 0, %v2491
    %v2493 = vrot.slane %v2488, %v2492
    %2496 = vrot.lane.b32.xlu0 %v2483, 32
    %v2497 = vpop.permute.xlu0 %2496
    %v2498 = vsel %vm113, %v2497, 0
    %2500 = vmatprep.subr.mxu0 0.0
    %2501 = vmatpush1.msra.mxu0 0.0
    %2502 = vmatprep.subr.mxu0 0.0
    %2503 = vmatpush1.msra.mxu0 0.0
    %2504 = vmatprep.subr.mxu0 0.0
    %2505 = vmatpush1.msra.mxu0 0.0
    %2506 = vmatprep.subr.mxu0 0.0
    %2507 = vmatpush1.msra.mxu0 0.0
    %2508 = vmatprep.subr.mxu0 0.0
    %2509 = vmatpush1.msra.mxu0 0.0
    %2510 = vmatprep.subr.mxu0 0.0
    %2511 = vmatpush1.msra.mxu0 0.0
    %2512 = vmatprep.subr.mxu0 0.0
    %2513 = vmatpush1.msra.mxu0 0.0
    %2514 = vmatprep.subr.mxu0 0.0
    %2515 = vmatpush1.msra.mxu0 0.0
    %2516 = vmatprep.subr.mxu0 0.0
    %2517 = vmatpush1.msra.mxu0 0.0
    %2518 = vmatprep.subr.mxu0 0.0
    %2519 = vmatpush1.msra.mxu0 0.0
    %2520 = vmatprep.subr.mxu0 0.0
    %2521 = vmatpush1.msra.mxu0 0.0
    %2522 = vmatprep.subr.mxu0 0.0
    %2523 = vmatpush1.msra.mxu0 0.0
    %2524 = vmatprep.subr.mxu0 0.0
    %2525 = vmatpush1.msra.mxu0 %v2487
    %2526 = vmatprep.subr.mxu0 0.0
    %2527 = vmatpush1.msra.mxu0 %v2486
    %2528 = vmatprep.subr.mxu0 0.0
    %2529 = vmatpush1.msra.mxu0 %v2485
    %2530 = vmatprep.subr.mxu0 0.0
    %2531 = vmatpush1.msra.mxu0 %v2484
    %2532 = vmatprep.subr.mxu0 0.0
    %2533 = vmatpush2.msra.mxu0 0.0
    %2534 = vmatprep.subr.mxu0 0.0
    %2535 = vmatpush2.msra.mxu0 0.0
    %2536 = vmatprep.subr.mxu0 0.0
    %2537 = vmatpush2.msra.mxu0 0.0
    %2538 = vmatprep.subr.mxu0 0.0
    %2539 = vmatpush2.msra.mxu0 0.0
    %2540 = vmatprep.subr.mxu0 0.0
    %2541 = vmatpush2.msra.mxu0 0.0
    %2542 = vmatprep.subr.mxu0 0.0
    %2543 = vmatpush2.msra.mxu0 0.0
    %2544 = vmatprep.subr.mxu0 0.0
    %2545 = vmatpush2.msra.mxu0 0.0
    %2546 = vmatprep.subr.mxu0 0.0
    %2547 = vmatpush2.msra.mxu0 0.0
    %2548 = vmatprep.subr.mxu0 0.0
    %2549 = vmatpush2.msra.mxu0 0.0
    %2550 = vmatprep.subr.mxu0 0.0
    %2551 = vmatpush2.msra.mxu0 0.0
    %2552 = vmatprep.subr.mxu0 0.0
    %2553 = vmatpush2.msra.mxu0 0.0
    %2554 = vmatprep.subr.mxu0 0.0
    %2555 = vmatpush2.msra.mxu0 0.0
    %2556 = vmatprep.subr.mxu0 0.0
    %2557 = vmatpush2.msra.mxu0 0.0
    %2558 = vmatprep.subr.mxu0 0.0
    %2559 = vmatpush2.msra.mxu0 0.0
    %2560 = vmatprep.subr.mxu0 0.0
    %2561 = vmatpush2.msra.mxu0 0.0
    %2562 = vmatprep.subr.mxu0 0.0
    %2563 = vmatpush2.msra.mxu0 0.0
    %2564 = vmatprep.mubr.f32.mxu0 0.0
    %2565 = vmatmul.mubr.f32.gmra.mxu0 %v2498
    %v2566 = vpop.f32.mrf.mxu0
    %v2567 = vadd.f32 %v2493, %v2566
    %v2568 = vpop.f32.mrf.mxu0
    %2569 = vdwg.mxu0
    %vm2570 = vcmask 31744
    %v2571 = vsel %vm2570, %v2567, -inf
    %2572 = vmax.xlane.f32.xlu0 %v2571
    %v2573 = vpop.xlane.xlu0 %2572
    %v2574 = vsub.f32 %v2567, %v2573
    %v2575 = vmul.f32 %v2574, 1.442695
    %v2576 = vpow.pop %v2575
    %v2577 = vsel %vm2570, %v2576, 0.0
    %2578 = vadd.xlane.f32.xlu0 %v2577
    %v2579 = vpop.xlane.xlu0 %2578
    %v2580 = vlog2.pop %v2579
    %v2581 = vmul.f32 %v2580, 0.6931472
    %v2582 = vsub.f32 %v2574, %v2581
    %2583 = vst.msk [vmem:[%s9] sm:$0xff] %vm2570, %v2582
    // Predicated region
    $region54: #{lstm_model_forward.1} parent=1 // pred_check
      _
    $region55: #{lstm_model_forward.1} parent=1 // pred_check_branch
      %2585 = sbr.rel (0) target = $region57
    $region56: #{lstm_model_forward.1} parent=1 // pred_region
      _
    $region57: #{lstm_model_forward.1} parent=1 // pred_fallthru
      _
    // Predicated region
    $region58: #{lstm_model_forward.1} parent=1 // pred_check
      _
    $region59: #{lstm_model_forward.1} parent=1 // pred_check_branch
      %2587 = sbr.rel (0) target = $region61
    $region60: #{lstm_model_forward.1} parent=1 // pred_region
      _
    $region61: #{lstm_model_forward.1} parent=1 // pred_fallthru
      _
    %2588 = vsyncpa [#allocation3], 1
    %2589 = vsyncpa [#allocation5], 1
    %2590 = vsyncpa [#allocation8], 1

</llo_original>
